<compile_context>
chip_gen: v7x
topology: tpu7x:2x2x1
jax: 0.10.0
libtpu: 0.0.40
codegen_flags: <defaults>
</compile_context>

<pallas_src>
import functools

import jax
import jax.numpy as jnp
from jax import lax
from jax.experimental import pallas as pl
from jax.experimental.pallas import tpu as pltpu


# --------------------------- device heuristics -------------------------------
def _tpu_kind():
    try:
        return jax.devices()[0].device_kind.lower()
    except Exception:
        return ""


def _gen_params():
    """Returns (preferred MXU N-tile, scoped-VMEM budget in bytes)."""
    kind = _tpu_kind()
    wide_mxu = any(t in kind for t in ("v6", "v7", "tpu7"))   # 2x256^2 MXU
    small_vmem = any(t in kind for t in ("v7", "tpu7"))       # 64 MiB VMEM
    vmem_cap = (48 if small_vmem else 100) * 1024 * 1024
    return (256 if wide_mxu else 128), vmem_cap


def _pick_row_tile(oh, ow, target_rows):
    """Largest divisor of OH <= target_rows whose flat row count is 8-aligned
    (or the full OH, which always satisfies the BlockSpec rule)."""
    divisors = [d for d in range(1, oh + 1) if oh % d == 0]
    ok = [d for d in divisors if d == oh or (d * ow) % 8 == 0]
    fits = [d for d in ok if d <= max(1, target_rows)]
    return max(fits) if fits else min(ok)


# ----------------------------- Pallas kernel ---------------------------------
def _conv_bn_kernel(x_ref, w_ref, shift_ref, out_ref, acc_ref, *,
                    kh, kw, c, oh_t, ow, stride, dilation, fold_kw):
    """One (OC tile, batch element, output-row tile) of fused conv + BN.

    x_ref:     (1, Hp, Wp, C)     bf16  full padded image (VMEM resident)
    w_ref:     (KH, KW*C, OCt)    bf16  BN-scale-folded weight tile
    shift_ref: (1, OCt)           f32   BN shift (beta - mean*scale)
    out_ref:   (1, oh_t*OW, OCt)  bf16  lane-dense flat output rows
    acc_ref:   (oh_t*OW, OCt)     f32   VMEM accumulator scratch
    """
    r = pl.program_id(2)                       # output-row tile (innermost)
    h_base = r * (oh_t * stride)
    m = oh_t * ow

    # Initialize the accumulator with the BN shift (saves the epilogue add).
    acc_ref[...] = jnp.broadcast_to(shift_ref[...], acc_ref.shape)

    for ih in range(kh):
        h0 = h_base + ih * dilation
        if fold_kw:
            # Small in-VMEM im2col along W: concat the KW shifted windows on
            # the lane (channel) axis so the MXU contraction is K = KW*C.
            parts = []
            for iw in range(kw):
                w0 = iw * dilation
                if stride == 1:
                    parts.append(x_ref[0, pl.ds(h0, oh_t), pl.ds(w0, ow), :])
                else:
                    parts.append(x_ref[0, pl.ds(h0, oh_t, stride),
                                       pl.ds(w0, ow, stride), :])
            win = parts[0] if kw == 1 else jnp.concatenate(parts, axis=-1)
            lhs = win.reshape(m, kw * c)       # leading-dim collapse only
            acc_ref[...] += jnp.dot(lhs, w_ref[ih],
                                    preferred_element_type=jnp.float32)
        else:
            # Large-C layers: per-tap K = C already fills the MXU.
            for iw in range(kw):
                w0 = iw * dilation
                if stride == 1:
                    win = x_ref[0, pl.ds(h0, oh_t), pl.ds(w0, ow), :]
                else:
                    win = x_ref[0, pl.ds(h0, oh_t, stride),
                                pl.ds(w0, ow, stride), :]
                acc_ref[...] += jnp.dot(win.reshape(m, c),
                                        w_ref[ih, iw * c:(iw + 1) * c, :],
                                        preferred_element_type=jnp.float32)

    out_ref[0] = acc_ref[...].astype(out_ref.dtype)


def _conv_bn(x_pad, w_folded, shift, *, kh, kw, oh, ow, stride, dilation,
             oc_tile, vmem_cap):
    """x_pad: (N, Hp, Wp, C) bf16; w_folded: (KH, KW*C, OCp) bf16;
    shift: (1, OCp) f32  ->  (N, OH*OW, OCp) bf16."""
    N, Hp, Wp, C = x_pad.shape
    OCp = w_folded.shape[-1]
    n_oc = OCp // oc_tile

    # Row tiling: keep f32 accumulator + double-buffered bf16 output rows
    # within ~1/4 of the VMEM budget so input/weight buffers have room.
    per_row_bytes = ow * oc_tile * (4 + 2 * 2)
    target_rows = max(1, (vmem_cap // 4) // per_row_bytes)
    oh_t = _pick_row_tile(oh, ow, target_rows)
    n_rows = oh // oh_t

    fold_kw = (kw > 1) and (C < 256)

    kernel = functools.partial(_conv_bn_kernel, kh=kh, kw=kw, c=C, oh_t=oh_t,
                               ow=ow, stride=stride, dilation=dilation,
                               fold_kw=fold_kw)

    # Grid order: larger operand's block index changes least.
    w_bytes = kh * kw * C * OCp * 2
    img_bytes = Hp * Wp * C * 2
    if w_bytes > img_bytes:          # deep layers: weights outermost
        grid = (n_oc, N, n_rows)
        x_map = lambda j, n, r: (n, 0, 0, 0)
        w_map = lambda j, n, r: (0, 0, j)
        s_map = lambda j, n, r: (0, j)
        o_map = lambda j, n, r: (n, r, j)
    else:                            # early layers: image outermost
        grid = (N, n_oc, n_rows)
        x_map = lambda n, j, r: (n, 0, 0, 0)
        w_map = lambda n, j, r: (0, 0, j)
        s_map = lambda n, j, r: (0, j)
        o_map = lambda n, j, r: (n, r, j)

    # Scoped VMEM from actual block sizes (double-buffered) + acc + headroom.
    need = (2 * (Hp * Wp * C * 2 + kh * kw * C * oc_tile * 2 + oc_tile * 4
                 + oh_t * ow * oc_tile * 2)
            + oh_t * ow * oc_tile * 4 + (4 << 20))
    vmem_limit = int(min(max(need, 32 << 20), vmem_cap))

    return pl.pallas_call(
        kernel,
        out_shape=jax.ShapeDtypeStruct((N, oh * ow, OCp), jnp.bfloat16),
        grid_spec=pltpu.PrefetchScalarGridSpec(
            num_scalar_prefetch=0,
            grid=grid,
            in_specs=[
                pl.BlockSpec((1, Hp, Wp, C), x_map),
                pl.BlockSpec((kh, kw * C, oc_tile), w_map),
                pl.BlockSpec((1, oc_tile), s_map),
            ],
            out_specs=pl.BlockSpec((1, oh_t * ow, oc_tile), o_map),
            scratch_shapes=[pltpu.VMEM((oh_t * ow, oc_tile), jnp.float32)],
        ),
        compiler_params=pltpu.CompilerParams(
            dimension_semantics=("parallel", "parallel", "parallel"),
            vmem_limit_bytes=vmem_limit),
    )(x_pad, w_folded, shift)


# ------------------------------ BasicConv2d ----------------------------------
class BasicConv2dPallas:
    """Conv2d(in, out, k, stride, padding, dilation, bias=False) + BatchNorm2d."""

    def __init__(self, in_planes, out_planes, kernel_size,
                 stride=1, padding=0, dilation=1, *, key, eps=1e-5):
        kh = kw = kernel_size
        self.in_planes = in_planes
        self.out_planes = out_planes
        self.kh, self.kw = kh, kw
        self.stride = stride
        self.padding = padding
        self.dilation = dilation
        self.eps = eps

        k_w, k_g, k_b, k_m, k_v = jax.random.split(key, 5)
        # Conv weight in PyTorch layout (OC, IC, KH, KW), deterministic init.
        self.weight = jax.random.normal(
            k_w, (out_planes, in_planes, kh, kw), jnp.float32) * 0.1
        # BatchNorm parameters / running stats (inference mode).
        self.gamma = 1.0 + 0.1 * jax.random.normal(k_g, (out_planes,), jnp.float32)
        self.beta = 0.1 * jax.random.normal(k_b, (out_planes,), jnp.float32)
        self.running_mean = 0.1 * jax.random.normal(k_m, (out_planes,), jnp.float32)
        self.running_var = jnp.abs(
            1.0 + 0.1 * jax.random.normal(k_v, (out_planes,), jnp.float32))

    def __call__(self, x_nchw):
        N, C, H, W = x_nchw.shape
        kh, kw = self.kh, self.kw
        s, p, d = self.stride, self.padding, self.dilation
        OH = (H + 2 * p - d * (kh - 1) - 1) // s + 1
        OW = (W + 2 * p - d * (kw - 1) - 1) // s + 1

        oc_pref, vmem_cap = _gen_params()
        OC = self.out_planes
        oc_tile = oc_pref if OC > 128 else 128
        OCp = ((OC + oc_tile - 1) // oc_tile) * oc_tile

        # ---- glue: NCHW -> NHWC, conv zero-padding, bf16 cast ----
        x = jnp.transpose(x_nchw, (0, 2, 3, 1))                    # (N, H, W, C)
        if p:
            x = jnp.pad(x, ((0, 0), (p, p), (p, p), (0, 0)))
        x = x.astype(jnp.bfloat16)

        # ---- fold BN (inference) into the conv weight; keep only the shift --
        scale = self.gamma / jnp.sqrt(self.running_var + self.eps)   # (OC,)
        shift = self.beta - self.running_mean * scale                # (OC,)
        w = jnp.transpose(self.weight, (2, 3, 1, 0)) * scale         # (KH,KW,C,OC)
        if OCp != OC:
            w = jnp.pad(w, ((0, 0), (0, 0), (0, 0), (0, OCp - OC)))
            shift = jnp.pad(shift, (0, OCp - OC))
        # Row index of the folded weight = iw*C + c (matches the in-kernel
        # lane-axis concatenation order).
        w = w.reshape(kh, kw * C, OCp).astype(jnp.bfloat16)
        shift = shift.reshape(1, OCp).astype(jnp.float32)

        # ---- hot path: fused conv (KW*C-folded matmuls) + BN in Pallas ------
        out = _conv_bn(x, w, shift, kh=kh, kw=kw, oh=OH, ow=OW, stride=s,
                       dilation=d, oc_tile=oc_tile, vmem_cap=vmem_cap)

        # ---- glue back to PyTorch-facing NCHW f32 ----
        out = out[:, :, :OC].astype(jnp.float32).reshape(N, OH, OW, OC)
        return jnp.transpose(out, (0, 3, 1, 2))


# ----------------------------- reference check -------------------------------
def _reference(mod: BasicConv2dPallas, x_nchw):
    conv = lax.conv_general_dilated(
        x_nchw, mod.weight,
        window_strides=(mod.stride, mod.stride),
        padding=((mod.padding, mod.padding), (mod.padding, mod.padding)),
        rhs_dilation=(mod.dilation, mod.dilation),
        dimension_numbers=("NCHW", "OIHW", "NCHW"))
    scale = mod.gamma / jnp.sqrt(mod.running_var + mod.eps)
    shift = mod.beta - mod.running_mean * scale
    return conv * scale[None, :, None, None] + shift[None, :, None, None]


if __name__ == "__main__":
    key = jax.random.PRNGKey(0)
    k_param, k_x = jax.random.split(key)

    # Small shapes consistent with the module: BasicConv2d(4, 8, 3, padding=1)
    mod = BasicConv2dPallas(in_planes=4, out_planes=8, kernel_size=3,
                            stride=1, padding=1, dilation=1, key=k_param)
    x = jax.random.normal(k_x, (2, 4, 16, 16), jnp.float32)   # NCHW

    y = jax.block_until_ready(mod(x))
    y_ref = jax.block_until_ready(_reference(mod, x))

    assert y.shape == y_ref.shape == (2, 8, 16, 16)
    # bf16 operands/output with f32 accumulation -> looser tolerance vs f32 ref.
    assert jnp.allclose(y, y_ref, atol=5e-2, rtol=5e-2), "mismatch vs reference"

    print("KERNEL_OK")
</pallas_src>

<mosaic_0001>
module attributes {stable_mosaic.version = 11 : i64} {
  func.func @_conv_bn_kernel(%arg0: i32, %arg1: i32, %arg2: i32, %arg3: memref<1x18x18x4xbf16, #tpu.memory_space<vmem>>, %arg4: memref<3x12x128xbf16, #tpu.memory_space<vmem>>, %arg5: memref<1x128xf32, #tpu.memory_space<vmem>>, %arg6: memref<1x256x128xbf16, #tpu.memory_space<vmem>>, %arg7: memref<256x128xf32, #tpu.memory_space<vmem>>) attributes {dimension_semantics = [#tpu.dimension_semantics<parallel>, #tpu.dimension_semantics<parallel>, #tpu.dimension_semantics<parallel>], iteration_bounds = array<i64: 1, 2, 1>, scalar_prefetch = 0 : i64, scratch_operands = 1 : i64, tpu.core_type = #tpu.core_type<tc>, window_params = [{transform_indices = @transform_0, window_bounds = array<i64: 1, 18, 18, 4>}, {transform_indices = @transform_1, window_bounds = array<i64: 3, 12, 128>}, {transform_indices = @transform_2, window_bounds = array<i64: 1, 128>}, {transform_indices = @transform_3, window_bounds = array<i64: 1, 256, 128>}]} {
    %c16_i32 = arith.constant 16 : i32
    %0 = arith.muli %arg2, %c16_i32 : i32
    %c0 = arith.constant 0 : index
    %c0_0 = arith.constant 0 : index
    %1 = vector.load %arg5[%c0, %c0_0] : memref<1x128xf32, #tpu.memory_space<vmem>>, vector<1x128xf32>
    %2 = vector.shape_cast %1 : vector<1x128xf32> to vector<1x128xf32>
    %3 = vector.broadcast %2 : vector<1x128xf32> to vector<256x128xf32>
    %c0_1 = arith.constant 0 : index
    %c0_2 = arith.constant 0 : index
    %4 = vector.load %arg7[%c0_1, %c0_2] : memref<256x128xf32, #tpu.memory_space<vmem>>, vector<256x128xf32>
    tpu.vector_store %arg7[%c0_1, %c0_2], %3 {strides = array<i32>} : memref<256x128xf32, #tpu.memory_space<vmem>>, vector<256x128xf32>,
    %c0_i32 = arith.constant 0 : i32
    %5 = arith.addi %0, %c0_i32 : i32
    %c0_3 = arith.constant 0 : index
    %6 = arith.index_cast %5 : i32 to index
    %c0_4 = arith.constant 0 : index
    %c0_5 = arith.constant 0 : index
    %7 = vector.load %arg3[%c0_3, %6, %c0_4, %c0_5] : memref<1x18x18x4xbf16, #tpu.memory_space<vmem>>, vector<1x16x16x4xbf16>
    %8 = vector.shape_cast %7 : vector<1x16x16x4xbf16> to vector<16x16x4xbf16>
    %c0_6 = arith.constant 0 : index
    %9 = arith.index_cast %5 : i32 to index
    %c1 = arith.constant 1 : index
    %c0_7 = arith.constant 0 : index
    %10 = vector.load %arg3[%c0_6, %9, %c1, %c0_7] : memref<1x18x18x4xbf16, #tpu.memory_space<vmem>>, vector<1x16x16x4xbf16>
    %11 = vector.shape_cast %10 : vector<1x16x16x4xbf16> to vector<16x16x4xbf16>
    %c0_8 = arith.constant 0 : index
    %12 = arith.index_cast %5 : i32 to index
    %c2 = arith.constant 2 : index
    %c0_9 = arith.constant 0 : index
    %13 = vector.load %arg3[%c0_8, %12, %c2, %c0_9] : memref<1x18x18x4xbf16, #tpu.memory_space<vmem>>, vector<1x16x16x4xbf16>
    %14 = vector.shape_cast %13 : vector<1x16x16x4xbf16> to vector<16x16x4xbf16>
    %15 = tpu.concatenate %8, %11, %14 in 2 : vector<16x16x4xbf16>, vector<16x16x4xbf16>, vector<16x16x4xbf16> -> vector<16x16x12xbf16>
    %16 = vector.shape_cast %15 : vector<16x16x12xbf16> to vector<256x12xbf16>
    %c0_10 = arith.constant 0 : index
    %c0_11 = arith.constant 0 : index
    %17 = vector.load %arg7[%c0_10, %c0_11] : memref<256x128xf32, #tpu.memory_space<vmem>>, vector<256x128xf32>
    %c0_12 = arith.constant 0 : index
    %c0_13 = arith.constant 0 : index
    %c0_14 = arith.constant 0 : index
    %18 = vector.load %arg4[%c0_12, %c0_13, %c0_14] : memref<3x12x128xbf16, #tpu.memory_space<vmem>>, vector<1x12x128xbf16>
    %19 = vector.shape_cast %18 : vector<1x12x128xbf16> to vector<12x128xbf16>
    %cst = arith.constant dense<0.000000e+00> : vector<256x128xf32>
    %20 = tpu.matmul %16, %19, %cst {dimension_numbers = #tpu.dot_dimension_numbers<[1], [0], [0], [1], [0, 0, 1, 1], [], []>} : vector<256x12xbf16>, vector<12x128xbf16>, vector<256x128xf32> -> vector<256x128xf32>
    %21 = arith.addf %17, %20 : vector<256x128xf32>
    %c0_15 = arith.constant 0 : index
    %c0_16 = arith.constant 0 : index
    %22 = vector.load %arg7[%c0_15, %c0_16] : memref<256x128xf32, #tpu.memory_space<vmem>>, vector<256x128xf32>
    tpu.vector_store %arg7[%c0_15, %c0_16], %21 {strides = array<i32>} : memref<256x128xf32, #tpu.memory_space<vmem>>, vector<256x128xf32>,
    %c1_i32 = arith.constant 1 : i32
    %23 = arith.addi %0, %c1_i32 : i32
    %c0_17 = arith.constant 0 : index
    %24 = arith.index_cast %23 : i32 to index
    %c0_18 = arith.constant 0 : index
    %c0_19 = arith.constant 0 : index
    %25 = vector.load %arg3[%c0_17, %24, %c0_18, %c0_19] : memref<1x18x18x4xbf16, #tpu.memory_space<vmem>>, vector<1x16x16x4xbf16>
    %26 = vector.shape_cast %25 : vector<1x16x16x4xbf16> to vector<16x16x4xbf16>
    %c0_20 = arith.constant 0 : index
    %27 = arith.index_cast %23 : i32 to index
    %c1_21 = arith.constant 1 : index
    %c0_22 = arith.constant 0 : index
    %28 = vector.load %arg3[%c0_20, %27, %c1_21, %c0_22] : memref<1x18x18x4xbf16, #tpu.memory_space<vmem>>, vector<1x16x16x4xbf16>
    %29 = vector.shape_cast %28 : vector<1x16x16x4xbf16> to vector<16x16x4xbf16>
    %c0_23 = arith.constant 0 : index
    %30 = arith.index_cast %23 : i32 to index
    %c2_24 = arith.constant 2 : index
    %c0_25 = arith.constant 0 : index
    %31 = vector.load %arg3[%c0_23, %30, %c2_24, %c0_25] : memref<1x18x18x4xbf16, #tpu.memory_space<vmem>>, vector<1x16x16x4xbf16>
    %32 = vector.shape_cast %31 : vector<1x16x16x4xbf16> to vector<16x16x4xbf16>
    %33 = tpu.concatenate %26, %29, %32 in 2 : vector<16x16x4xbf16>, vector<16x16x4xbf16>, vector<16x16x4xbf16> -> vector<16x16x12xbf16>
    %34 = vector.shape_cast %33 : vector<16x16x12xbf16> to vector<256x12xbf16>
    %c0_26 = arith.constant 0 : index
    %c0_27 = arith.constant 0 : index
    %35 = vector.load %arg7[%c0_26, %c0_27] : memref<256x128xf32, #tpu.memory_space<vmem>>, vector<256x128xf32>
    %c1_28 = arith.constant 1 : index
    %c0_29 = arith.constant 0 : index
    %c0_30 = arith.constant 0 : index
    %36 = vector.load %arg4[%c1_28, %c0_29, %c0_30] : memref<3x12x128xbf16, #tpu.memory_space<vmem>>, vector<1x12x128xbf16>
    %37 = vector.shape_cast %36 : vector<1x12x128xbf16> to vector<12x128xbf16>
    %cst_31 = arith.constant dense<0.000000e+00> : vector<256x128xf32>
    %38 = tpu.matmul %34, %37, %cst_31 {dimension_numbers = #tpu.dot_dimension_numbers<[1], [0], [0], [1], [0, 0, 1, 1], [], []>} : vector<256x12xbf16>, vector<12x128xbf16>, vector<256x128xf32> -> vector<256x128xf32>
    %39 = arith.addf %35, %38 : vector<256x128xf32>
    %c0_32 = arith.constant 0 : index
    %c0_33 = arith.constant 0 : index
    %40 = vector.load %arg7[%c0_32, %c0_33] : memref<256x128xf32, #tpu.memory_space<vmem>>, vector<256x128xf32>
    tpu.vector_store %arg7[%c0_32, %c0_33], %39 {strides = array<i32>} : memref<256x128xf32, #tpu.memory_space<vmem>>, vector<256x128xf32>,
    %c2_i32 = arith.constant 2 : i32
    %41 = arith.addi %0, %c2_i32 : i32
    %c0_34 = arith.constant 0 : index
    %42 = arith.index_cast %41 : i32 to index
    %c0_35 = arith.constant 0 : index
    %c0_36 = arith.constant 0 : index
    %43 = vector.load %arg3[%c0_34, %42, %c0_35, %c0_36] : memref<1x18x18x4xbf16, #tpu.memory_space<vmem>>, vector<1x16x16x4xbf16>
    %44 = vector.shape_cast %43 : vector<1x16x16x4xbf16> to vector<16x16x4xbf16>
    %c0_37 = arith.constant 0 : index
    %45 = arith.index_cast %41 : i32 to index
    %c1_38 = arith.constant 1 : index
    %c0_39 = arith.constant 0 : index
    %46 = vector.load %arg3[%c0_37, %45, %c1_38, %c0_39] : memref<1x18x18x4xbf16, #tpu.memory_space<vmem>>, vector<1x16x16x4xbf16>
    %47 = vector.shape_cast %46 : vector<1x16x16x4xbf16> to vector<16x16x4xbf16>
    %c0_40 = arith.constant 0 : index
    %48 = arith.index_cast %41 : i32 to index
    %c2_41 = arith.constant 2 : index
    %c0_42 = arith.constant 0 : index
    %49 = vector.load %arg3[%c0_40, %48, %c2_41, %c0_42] : memref<1x18x18x4xbf16, #tpu.memory_space<vmem>>, vector<1x16x16x4xbf16>
    %50 = vector.shape_cast %49 : vector<1x16x16x4xbf16> to vector<16x16x4xbf16>
    %51 = tpu.concatenate %44, %47, %50 in 2 : vector<16x16x4xbf16>, vector<16x16x4xbf16>, vector<16x16x4xbf16> -> vector<16x16x12xbf16>
    %52 = vector.shape_cast %51 : vector<16x16x12xbf16> to vector<256x12xbf16>
    %c0_43 = arith.constant 0 : index
    %c0_44 = arith.constant 0 : index
    %53 = vector.load %arg7[%c0_43, %c0_44] : memref<256x128xf32, #tpu.memory_space<vmem>>, vector<256x128xf32>
    %c2_45 = arith.constant 2 : index
    %c0_46 = arith.constant 0 : index
    %c0_47 = arith.constant 0 : index
    %54 = vector.load %arg4[%c2_45, %c0_46, %c0_47] : memref<3x12x128xbf16, #tpu.memory_space<vmem>>, vector<1x12x128xbf16>
    %55 = vector.shape_cast %54 : vector<1x12x128xbf16> to vector<12x128xbf16>
    %cst_48 = arith.constant dense<0.000000e+00> : vector<256x128xf32>
    %56 = tpu.matmul %52, %55, %cst_48 {dimension_numbers = #tpu.dot_dimension_numbers<[1], [0], [0], [1], [0, 0, 1, 1], [], []>} : vector<256x12xbf16>, vector<12x128xbf16>, vector<256x128xf32> -> vector<256x128xf32>
    %57 = arith.addf %53, %56 : vector<256x128xf32>
    %c0_49 = arith.constant 0 : index
    %c0_50 = arith.constant 0 : index
    %58 = vector.load %arg7[%c0_49, %c0_50] : memref<256x128xf32, #tpu.memory_space<vmem>>, vector<256x128xf32>
    tpu.vector_store %arg7[%c0_49, %c0_50], %57 {strides = array<i32>} : memref<256x128xf32, #tpu.memory_space<vmem>>, vector<256x128xf32>,
    %c0_51 = arith.constant 0 : index
    %c0_52 = arith.constant 0 : index
    %59 = vector.load %arg7[%c0_51, %c0_52] : memref<256x128xf32, #tpu.memory_space<vmem>>, vector<256x128xf32>
    %60 = arith.truncf %59 : vector<256x128xf32> to vector<256x128xbf16>
    %c0_53 = arith.constant 0 : index
    %c0_54 = arith.constant 0 : index
    %c0_55 = arith.constant 0 : index
    %61 = vector.load %arg6[%c0_53, %c0_54, %c0_55] : memref<1x256x128xbf16, #tpu.memory_space<vmem>>, vector<1x256x128xbf16>
    %62 = vector.shape_cast %61 : vector<1x256x128xbf16> to vector<256x128xbf16>
    %63 = vector.shape_cast %60 : vector<256x128xbf16> to vector<1x256x128xbf16>
    tpu.vector_store %arg6[%c0_53, %c0_54, %c0_55], %63 {strides = array<i32>} : memref<1x256x128xbf16, #tpu.memory_space<vmem>>, vector<1x256x128xbf16>,
    return
  }
  func.func @transform_0(%arg0: i32, %arg1: i32, %arg2: i32) -> (i32, i32, i32, i32) {
    %c0_i32 = arith.constant 0 : i32
    %c0_i32_0 = arith.constant 0 : i32
    %c0_i32_1 = arith.constant 0 : i32
    %c0_i32_2 = arith.constant 0 : i32
    return %arg1, %c0_i32, %c0_i32_0, %c0_i32_1 : i32, i32, i32, i32
  }
  func.func @transform_1(%arg0: i32, %arg1: i32, %arg2: i32) -> (i32, i32, i32) {
    %c0_i32 = arith.constant 0 : i32
    %c0_i32_0 = arith.constant 0 : i32
    %c0_i32_1 = arith.constant 0 : i32
    return %c0_i32, %c0_i32_0, %arg0 : i32, i32, i32
  }
  func.func @transform_2(%arg0: i32, %arg1: i32, %arg2: i32) -> (i32, i32) {
    %c0_i32 = arith.constant 0 : i32
    %c0_i32_0 = arith.constant 0 : i32
    return %c0_i32, %arg0 : i32, i32
  }
  func.func @transform_3(%arg0: i32, %arg1: i32, %arg2: i32) -> (i32, i32, i32) {
    %c0_i32 = arith.constant 0 : i32
    return %arg1, %arg2, %arg0 : i32, i32, i32
  }
}

</mosaic_0001>

<llo_original>
// kernel: tpu_custom_call.1
$region0: #{tpu_custom_call.1}
  #allocation0 [shape = 'u32[]', space=smem, size = 0x4, offset = 0x4, fixed_abs, tag = 'smem constant byte address 0x4 - core index']
  #allocation1 [shape = 'u32[144,128]{1,0:T(1,128)}', space=vmem, size = 0x12000, scoped, tag = 'internal scratch']
  #allocation2 [shape = 'f32[256,128]{1,0:T(8,128)}', space=vmem, size = 0x20000, scoped, tag = 'scratch operand']
  %s0 = inlined_call_operand.vmem [shape: bf16[2,18,18,4], index: 0, kind: input, shape index: {}]
  %s1 = inlined_call_operand.vmem [shape: bf16[3,12,128], index: 1, kind: input, shape index: {}]
  %s2 = inlined_call_operand.vmem [shape: f32[1,128], index: 2, kind: input, shape index: {}]
  %s3 = inlined_call_operand.hbm [shape: bf16[2,256,128], index: 3, kind: output, shape index: {}]
  %s4 = sld [smem:[#allocation0]]
  $region45: #{tpu_custom_call.1} parent=0
    _
  %s6 = ssub.s32 1, %s4
  %s7 = scalar_select 0, %s6, %s4
  $region1: #{tpu_custom_call.1} parent=0
    #allocation3 [shape = 'u8[131072]{0}', space=vmem, size = 0x20000, scoped, tag = 'output window, operand 0']
    #allocation4 [shape = 's32[2]{0}', space=sflag, size = 0x8, scoped, tag = 'scoped memory for tpu_custom_call.1']
    %8 = vsyncpa [#allocation4], 0
    %s9 = scalar_lea.sflag [#allocation4], 1
    %10 = vsyncpa %s9, 0
    loop: start=0, step=1, limit=4
    $region2: #{tpu_custom_call.1} parent=1 // loop_pre_header
      _
    $region3: #{tpu_custom_call.1} parent=1 // loop_header
      %s12 = sphi 0, %s16
      %p13 = scmp.ge.s32.totalorder %s12, 4
      %s19 = sphi 0, %s38
      %s20 = sphi 0, %s34
      %s21 = sphi 0, %s30
      %s22 = sphi 0, %s19
      %s23 = sphi 0, %s20
      %s24 = sphi 0, %s21
      %s25 = sphi 0, %s22
      %s26 = sphi 0, %s23
      %s27 = sphi 0, %s24
      %s41 = sphi 0, %s43
      %s44 = sphi 0, %s41
      %s45 = sphi 0, %s44
      %s61 = sphi 0, %s45
      %s67 = sphi 0, %s69
      %s70 = sphi 0, %s67
      %s71 = sphi 0, %s70
      %s87 = sphi 0, %s71
      %s93 = sphi 0, %s95
      %s96 = sphi 0, %s93
      %s97 = sphi 0, %s96
      %s113 = sphi 0, %s97
      %s123 = sphi 0, %s125
      %s126 = sphi 0, %s123
      %s127 = sphi 0, %s126
      %s143 = sphi 0, %s127
    $region4: #{tpu_custom_call.1} parent=1 // loop_header_branch
      %15 = sbr.rel (%p13) target = $region8
    $region5: #{tpu_custom_call.1} parent=1 // loop_body
      %s17 = ssub.s32 %s12, 1
      %s18 = ssub.s32 %s12, 2
      %s28 = sadd.s32 1, %s21
      %p29 = scmp.ge.s32.totalorder %s28, 1
      %s30 = scalar_select %p29, 0, %s28
      %s31 = sadd.s32 1, %s20
      %s32 = scalar_select %p29, %s31, %s20
      %p33 = scmp.ge.s32.totalorder %s32, 2
      %s34 = scalar_select %p33, 0, %s32
      %s35 = sadd.s32 1, %s19
      %s36 = scalar_select %p33, %s35, %s19
      %p37 = scmp.ge.s32.totalorder %s36, 1
      %s38 = scalar_select %p37, 0, %s36
      %s39 = ssub.s32 %s20, %s34
      %p40 = scmp.eq.s32.totalorder %s39, 0
      %s42 = sadd.s32 %s41, 1
      %s43 = scalar_select %p40, %s41, %s42
      %p46 = pneg %p40
      %p47 = scmp.eq.s32.totalorder %s12, 1
      %p48 = por %p46, %p47
      %p49 = scmp.ne.s32.totalorder %s41, %s44
      %p50 = scmp.eq.s32.totalorder %s12, 0
      %p51 = por %p49, %p50
      %p52 = scmp.ne.s32.totalorder %s41, %s44
      %p53 = scmp.eq.s32.totalorder %s17, 1
      %p54 = por %p52, %p53
      %p55 = scmp.ne.s32.totalorder %s44, %s45
      %p56 = scmp.eq.s32.totalorder %s17, 0
      %p57 = por %p55, %p56
      %p58 = scmp.ne.s32.totalorder %s44, %s45
      %p59 = scmp.eq.s32.totalorder %s18, 1
      %p60 = por %p58, %p59
      %p62 = scmp.ne.s32.totalorder %s45, %s61
      %p63 = scmp.eq.s32.totalorder %s18, 0
      %p64 = por %p62, %p63
      %s65 = ssub.s32 %s19, %s38
      %p66 = scmp.eq.s32.totalorder %s65, 0
      %s68 = sadd.s32 %s67, 1
      %s69 = scalar_select %p66, %s67, %s68
      %p72 = pneg %p66
      %p73 = scmp.eq.s32.totalorder %s12, 1
      %p74 = por %p72, %p73
      %p75 = scmp.ne.s32.totalorder %s67, %s70
      %p76 = scmp.eq.s32.totalorder %s12, 0
      %p77 = por %p75, %p76
      %p78 = scmp.ne.s32.totalorder %s67, %s70
      %p79 = scmp.eq.s32.totalorder %s17, 1
      %p80 = por %p78, %p79
      %p81 = scmp.ne.s32.totalorder %s70, %s71
      %p82 = scmp.eq.s32.totalorder %s17, 0
      %p83 = por %p81, %p82
      %p84 = scmp.ne.s32.totalorder %s70, %s71
      %p85 = scmp.eq.s32.totalorder %s18, 1
      %p86 = por %p84, %p85
      %p88 = scmp.ne.s32.totalorder %s71, %s87
      %p89 = scmp.eq.s32.totalorder %s18, 0
      %p90 = por %p88, %p89
      %s91 = ssub.s32 %s19, %s38
      %p92 = scmp.eq.s32.totalorder %s91, 0
      %s94 = sadd.s32 %s93, 1
      %s95 = scalar_select %p92, %s93, %s94
      %p98 = pneg %p92
      %p99 = scmp.eq.s32.totalorder %s12, 1
      %p100 = por %p98, %p99
      %p101 = scmp.ne.s32.totalorder %s93, %s96
      %p102 = scmp.eq.s32.totalorder %s12, 0
      %p103 = por %p101, %p102
      %p104 = scmp.ne.s32.totalorder %s93, %s96
      %p105 = scmp.eq.s32.totalorder %s17, 1
      %p106 = por %p104, %p105
      %p107 = scmp.ne.s32.totalorder %s96, %s97
      %p108 = scmp.eq.s32.totalorder %s17, 0
      %p109 = por %p107, %p108
      %p110 = scmp.ne.s32.totalorder %s96, %s97
      %p111 = scmp.eq.s32.totalorder %s18, 1
      %p112 = por %p110, %p111
      %p114 = scmp.ne.s32.totalorder %s97, %s113
      %p115 = scmp.eq.s32.totalorder %s18, 0
      %p116 = por %p114, %p115
      %s117 = ssub.s32 %s20, %s34
      %s118 = ssub.s32 %s21, %s30
      %s119 = sor.u32 %s117, %s118
      %s120 = ssub.s32 %s19, %s38
      %s121 = sor.u32 %s119, %s120
      %p122 = scmp.eq.s32.totalorder %s121, 0
      %s124 = sadd.s32 %s123, 1
      %s125 = scalar_select %p122, %s123, %s124
      %p128 = pneg %p122
      %p129 = scmp.eq.s32.totalorder %s12, 1
      %p130 = por %p128, %p129
      %p131 = scmp.ne.s32.totalorder %s123, %s126
      %p132 = scmp.eq.s32.totalorder %s12, 0
      %p133 = por %p131, %p132
      %p134 = scmp.ne.s32.totalorder %s123, %s126
      %p135 = scmp.eq.s32.totalorder %s17, 1
      %p136 = por %p134, %p135
      %p137 = scmp.ne.s32.totalorder %s126, %s127
      %p138 = scmp.eq.s32.totalorder %s17, 0
      %p139 = por %p137, %p138
      %p140 = scmp.ne.s32.totalorder %s126, %s127
      %p141 = scmp.eq.s32.totalorder %s18, 1
      %p142 = por %p140, %p141
      %p144 = scmp.ne.s32.totalorder %s127, %s143
      %p145 = scmp.eq.s32.totalorder %s18, 0
      %p146 = por %p144, %p145
      %p147 = scmp.le.s32.totalorder 1, %s12
      %p148 = scmp.lt.s32.totalorder %s12, 3
      %p149 = pnand %p147, %p148
      %p150 = pneg %p149
      // Predicated region
      $region9: #{tpu_custom_call.1} parent=5 // pred_check
        _
      $region10: #{tpu_custom_call.1} parent=5 // pred_check_branch
        %152 = sbr.rel (%p149) target = $region12
      $region11: #{tpu_custom_call.1} parent=5 // pred_region
        %s153 = ssub.s32 %s12, 1
        // Predicated region
        $region13: #{tpu_custom_call.1} parent=11 // pred_check
          %p154 = pneg %p83
        $region14: #{tpu_custom_call.1} parent=11 // pred_check_branch
          %156 = sbr.rel (%p154) target = $region16
        $region15: #{tpu_custom_call.1} parent=11 // pred_region
          %p157 = scmp.lt.s32.totalorder %s22, 0
          %s158 = scalar_select %p157, %s22, 0
          %s159 = smul.addr %s158, 4
          %s160 = scalar_lea.vmem %s1, %s159
        $region16: #{tpu_custom_call.1} parent=11 // pred_fallthru
          _
        // Predicated region
        $region17: #{tpu_custom_call.1} parent=11 // pred_check
          %p161 = pneg %p109
        $region18: #{tpu_custom_call.1} parent=11 // pred_check_branch
          %163 = sbr.rel (%p161) target = $region20
        $region19: #{tpu_custom_call.1} parent=11 // pred_region
          %p164 = scmp.lt.s32.totalorder %s22, 0
          %s165 = scalar_select %p164, %s22, 0
          %s166 = scalar_lea.vmem %s2, %s165
        $region20: #{tpu_custom_call.1} parent=11 // pred_fallthru
          _
      $region12: #{tpu_custom_call.1} parent=5 // pred_fallthru
        _
      %p167 = scmp.lt.s32.totalorder %s12, 2
      // Predicated region
      $region21: #{tpu_custom_call.1} parent=5 // pred_check
        %p168 = pneg %p167
      $region22: #{tpu_custom_call.1} parent=5 // pred_check_branch
        %170 = sbr.rel (%p168) target = $region24
      $region23: #{tpu_custom_call.1} parent=5 // pred_region
        // Predicated region
        $region25: #{tpu_custom_call.1} parent=23 // pred_check
          %p171 = pneg %p51
        $region26: #{tpu_custom_call.1} parent=23 // pred_check_branch
          %173 = sbr.rel (%p171) target = $region28
        $region27: #{tpu_custom_call.1} parent=23 // pred_region
          %p174 = scmp.lt.s32.totalorder %s20, 1
          %s175 = scalar_select %p174, %s20, 1
          %s176 = smul.addr %s175, 54
          %s177 = smul.addr %s176, 4
          %s178 = scalar_lea.vmem %s0, %s177
        $region28: #{tpu_custom_call.1} parent=23 // pred_fallthru
          _
      $region24: #{tpu_custom_call.1} parent=5 // pred_fallthru
        _
      %p179 = scmp.le.s32.totalorder 1, %s12
      %p180 = scmp.lt.s32.totalorder %s12, 3
      %p181 = pnand %p179, %p180
      %p182 = pneg %p181
      // Predicated region
      $region29: #{tpu_custom_call.1} parent=5 // pred_check
        _
      $region30: #{tpu_custom_call.1} parent=5 // pred_check_branch
        %184 = sbr.rel (%p181) target = $region32
      $region31: #{tpu_custom_call.1} parent=5 // pred_region
        %s185 = ssub.s32 %s12, 1
        %p186 = scmp.lt.s32.totalorder %s23, 1
        %s187 = scalar_select %p186, %s23, 1
        %s188 = smul.addr %s187, 54
        %s189 = smul.addr %s188, 4
        %s190 = scalar_lea.vmem %s0, %s189
        %p191 = pneg %p57
        %p192 = pneg %p54
        %p193 = scmp.lt.s32.totalorder %s22, 0
        %s194 = scalar_select %p193, %s22, 0
        %s195 = smul.addr %s194, 4
        %s196 = scalar_lea.vmem %s1, %s195
        %p197 = pneg %p83
        %p198 = pneg %p80
        %p199 = scmp.lt.s32.totalorder %s22, 0
        %s200 = scalar_select %p199, %s22, 0
        %s201 = scalar_lea.vmem %s2, %s200
        %p202 = pneg %p109
        %p203 = pneg %p106
        %p204 = pneg %p139
        %p205 = pneg %p136
        %s206 = sand.u32 %s126, 1
        %s207 = scalar_lea.sflag [#allocation4], %s206
        %s208 = sand.u32 %s126, 1
        %s209 = smul.addr %s208, 128
        %s210 = scalar_lea.vmem [#allocation3], %s209
        %p211 = scmp.lt.s32.totalorder %s23, 1
        %s212 = scalar_select %p211, %s23, 1
        %s213 = smul.addr %s212, 54
        %s214 = smul.addr %s213, 4
        %s215 = scalar_lea.vmem %s0, %s214
        %p216 = scmp.lt.s32.totalorder %s22, 0
        %s217 = scalar_select %p216, %s22, 0
        %s218 = smul.addr %s217, 4
        %s219 = scalar_lea.vmem %s1, %s218
        %p220 = scmp.lt.s32.totalorder %s22, 0
        %s221 = scalar_select %p220, %s22, 0
        %s222 = scalar_lea.vmem %s2, %s221
        %s223 = smul.u32 32, %s24
        %s225 = smul.u32 %s24, 16
        %v226 = vld [vmem:[%s222] sm:$0x1]
        %v228 = vlaneseq
        %v229 = vshrl.u32 %v228, 7
        %v230 = vsub.s32 0, %v229
        %v231 = vrot.slane %v226, %v230
        %233 = vst [vmem:[#allocation2] sm:$0xff] %v231
        %234 = vst [vmem:[#allocation2 + $0x8] sm:$0xff] %v231
        %235 = vst [vmem:[#allocation2 + $0x10] sm:$0xff] %v231
        %236 = vst [vmem:[#allocation2 + $0x18] sm:$0xff] %v231
        %237 = vst [vmem:[#allocation2 + $0x20] sm:$0xff] %v231
        %238 = vst [vmem:[#allocation2 + $0x28] sm:$0xff] %v231
        %239 = vst [vmem:[#allocation2 + $0x30] sm:$0xff] %v231
        %240 = vst [vmem:[#allocation2 + $0x38] sm:$0xff] %v231
        %241 = vst [vmem:[#allocation2 + $0x40] sm:$0xff] %v231
        %242 = vst [vmem:[#allocation2 + $0x48] sm:$0xff] %v231
        %243 = vst [vmem:[#allocation2 + $0x50] sm:$0xff] %v231
        %244 = vst [vmem:[#allocation2 + $0x58] sm:$0xff] %v231
        %245 = vst [vmem:[#allocation2 + $0x60] sm:$0xff] %v231
        %246 = vst [vmem:[#allocation2 + $0x68] sm:$0xff] %v231
        %247 = vst [vmem:[#allocation2 + $0x70] sm:$0xff] %v231
        %248 = vst [vmem:[#allocation2 + $0x78] sm:$0xff] %v231
        %249 = vst [vmem:[#allocation2 + $0x80] sm:$0xff] %v231
        %250 = vst [vmem:[#allocation2 + $0x88] sm:$0xff] %v231
        %251 = vst [vmem:[#allocation2 + $0x90] sm:$0xff] %v231
        %252 = vst [vmem:[#allocation2 + $0x98] sm:$0xff] %v231
        %253 = vst [vmem:[#allocation2 + $0xa0] sm:$0xff] %v231
        %254 = vst [vmem:[#allocation2 + $0xa8] sm:$0xff] %v231
        %255 = vst [vmem:[#allocation2 + $0xb0] sm:$0xff] %v231
        %256 = vst [vmem:[#allocation2 + $0xb8] sm:$0xff] %v231
        %257 = vst [vmem:[#allocation2 + $0xc0] sm:$0xff] %v231
        %258 = vst [vmem:[#allocation2 + $0xc8] sm:$0xff] %v231
        %259 = vst [vmem:[#allocation2 + $0xd0] sm:$0xff] %v231
        %260 = vst [vmem:[#allocation2 + $0xd8] sm:$0xff] %v231
        %261 = vst [vmem:[#allocation2 + $0xe0] sm:$0xff] %v231
        %262 = vst [vmem:[#allocation2 + $0xe8] sm:$0xff] %v231
        %263 = vst [vmem:[#allocation2 + $0xf0] sm:$0xff] %v231
        %264 = vst [vmem:[#allocation2 + $0xf8] sm:$0xff] %v231
        %s265 = smul.u32 %s225, 3
        %s266 = smul.addr %s265, 4
        %s267 = scalar_lea.vmem %s215, %s266
        %v268 = vld [vmem:[%s267] sm:$0xf]
        %v269 = vld [vmem:[%s267 + $0x4] sm:$0xf]
        %v270 = vld [vmem:[%s267 + $0xc] sm:$0xf]
        %v271 = vld [vmem:[%s267 + $0x10] sm:$0xf]
        %v272 = vld [vmem:[%s267 + $0x18] sm:$0xf]
        %v273 = vld [vmem:[%s267 + $0x1c] sm:$0xf]
        %v274 = vld [vmem:[%s267 + $0x24] sm:$0xf]
        %v275 = vld [vmem:[%s267 + $0x28] sm:$0xf]
        %v276 = vld [vmem:[%s267 + $0x30] sm:$0xf]
        %v277 = vld [vmem:[%s267 + $0x34] sm:$0xf]
        %v278 = vld [vmem:[%s267 + $0x3c] sm:$0xf]
        %v279 = vld [vmem:[%s267 + $0x40] sm:$0xf]
        %v280 = vld [vmem:[%s267 + $0x48] sm:$0xf]
        %v281 = vld [vmem:[%s267 + $0x4c] sm:$0xf]
        %v282 = vld [vmem:[%s267 + $0x54] sm:$0xf]
        %v283 = vld [vmem:[%s267 + $0x58] sm:$0xf]
        %v284 = vld [vmem:[%s267 + $0x60] sm:$0xf]
        %v285 = vld [vmem:[%s267 + $0x64] sm:$0xf]
        %v286 = vld [vmem:[%s267 + $0x6c] sm:$0xf]
        %v287 = vld [vmem:[%s267 + $0x70] sm:$0xf]
        %v288 = vld [vmem:[%s267 + $0x78] sm:$0xf]
        %v289 = vld [vmem:[%s267 + $0x7c] sm:$0xf]
        %v290 = vld [vmem:[%s267 + $0x84] sm:$0xf]
        %v291 = vld [vmem:[%s267 + $0x88] sm:$0xf]
        %v292 = vld [vmem:[%s267 + $0x90] sm:$0xf]
        %v293 = vld [vmem:[%s267 + $0x94] sm:$0xf]
        %v294 = vld [vmem:[%s267 + $0x9c] sm:$0xf]
        %v295 = vld [vmem:[%s267 + $0xa0] sm:$0xf]
        %v296 = vld [vmem:[%s267 + $0xa8] sm:$0xf]
        %v297 = vld [vmem:[%s267 + $0xac] sm:$0xf]
        %v298 = vld [vmem:[%s267 + $0xb4] sm:$0xf]
        %v299 = vld [vmem:[%s267 + $0xb8] sm:$0xf]
        %v300 = vld [vmem:[%s267 + $0x8] sm:$0x1]
        %v301 = vld [vmem:[%s267 + $0x14] sm:$0x1]
        %v302 = vld [vmem:[%s267 + $0x20] sm:$0x1]
        %v303 = vld [vmem:[%s267 + $0x2c] sm:$0x1]
        %v304 = vld [vmem:[%s267 + $0x38] sm:$0x1]
        %v305 = vld [vmem:[%s267 + $0x44] sm:$0x1]
        %v306 = vld [vmem:[%s267 + $0x50] sm:$0x1]
        %v307 = vld [vmem:[%s267 + $0x5c] sm:$0x1]
        %v308 = vld [vmem:[%s267 + $0x68] sm:$0x1]
        %v309 = vld [vmem:[%s267 + $0x74] sm:$0x1]
        %v310 = vld [vmem:[%s267 + $0x80] sm:$0x1]
        %v311 = vld [vmem:[%s267 + $0x8c] sm:$0x1]
        %v312 = vld [vmem:[%s267 + $0x98] sm:$0x1]
        %v313 = vld [vmem:[%s267 + $0xa4] sm:$0x1]
        %v314 = vld [vmem:[%s267 + $0xb0] sm:$0x1]
        %v315 = vld [vmem:[%s267 + $0xbc] sm:$0x1]
        %v316 = vld [vmem:[%s267] sm:$0xe]
        %v317 = vld [vmem:[%s267 + $0xc] sm:$0xe]
        %v318 = vld [vmem:[%s267 + $0x18] sm:$0xe]
        %v319 = vld [vmem:[%s267 + $0x24] sm:$0xe]
        %v320 = vld [vmem:[%s267 + $0x30] sm:$0xe]
        %v321 = vld [vmem:[%s267 + $0x3c] sm:$0xe]
        %v322 = vld [vmem:[%s267 + $0x48] sm:$0xe]
        %v323 = vld [vmem:[%s267 + $0x54] sm:$0xe]
        %v324 = vld [vmem:[%s267 + $0x60] sm:$0xe]
        %v325 = vld [vmem:[%s267 + $0x6c] sm:$0xe]
        %v326 = vld [vmem:[%s267 + $0x78] sm:$0xe]
        %v327 = vld [vmem:[%s267 + $0x84] sm:$0xe]
        %v328 = vld [vmem:[%s267 + $0x90] sm:$0xe]
        %v329 = vld [vmem:[%s267 + $0x9c] sm:$0xe]
        %v330 = vld [vmem:[%s267 + $0xa8] sm:$0xe]
        %v331 = vld [vmem:[%s267 + $0xb4] sm:$0xe]
        %v364 = vunpack.c.l.b16 %v268
        %v365 = vunpack.c.l.b16 %v269
        %v366 = vunpack.c.l.b16 %v270
        %v367 = vunpack.c.l.b16 %v271
        %v368 = vunpack.c.l.b16 %v272
        %v369 = vunpack.c.l.b16 %v273
        %v370 = vunpack.c.l.b16 %v274
        %v371 = vunpack.c.l.b16 %v275
        %v372 = vunpack.c.l.b16 %v276
        %v373 = vunpack.c.l.b16 %v277
        %v374 = vunpack.c.l.b16 %v278
        %v375 = vunpack.c.l.b16 %v279
        %v376 = vunpack.c.l.b16 %v280
        %v377 = vunpack.c.l.b16 %v281
        %v378 = vunpack.c.l.b16 %v282
        %v379 = vunpack.c.l.b16 %v283
        %v380 = vunpack.c.l.b16 %v284
        %v381 = vunpack.c.l.b16 %v285
        %v382 = vunpack.c.l.b16 %v286
        %v383 = vunpack.c.l.b16 %v287
        %v384 = vunpack.c.l.b16 %v288
        %v385 = vunpack.c.l.b16 %v289
        %v386 = vunpack.c.l.b16 %v290
        %v387 = vunpack.c.l.b16 %v291
        %v388 = vunpack.c.l.b16 %v292
        %v389 = vunpack.c.l.b16 %v293
        %v390 = vunpack.c.l.b16 %v294
        %v391 = vunpack.c.l.b16 %v295
        %v392 = vunpack.c.l.b16 %v296
        %v393 = vunpack.c.l.b16 %v297
        %v394 = vunpack.c.l.b16 %v298
        %v395 = vunpack.c.l.b16 %v299
        %v396 = vpack.c.b16 %v365, %v364
        %v397 = vpack.c.b16 %v367, %v366
        %v398 = vpack.c.b16 %v369, %v368
        %v399 = vpack.c.b16 %v371, %v370
        %v400 = vpack.c.b16 %v373, %v372
        %v401 = vpack.c.b16 %v375, %v374
        %v402 = vpack.c.b16 %v377, %v376
        %v403 = vpack.c.b16 %v379, %v378
        %v404 = vpack.c.b16 %v381, %v380
        %v405 = vpack.c.b16 %v383, %v382
        %v406 = vpack.c.b16 %v385, %v384
        %v407 = vpack.c.b16 %v387, %v386
        %v408 = vpack.c.b16 %v389, %v388
        %v409 = vpack.c.b16 %v391, %v390
        %v410 = vpack.c.b16 %v393, %v392
        %v411 = vpack.c.b16 %v395, %v394
        %v428 = vunpack.c.l.b16 %v300
        %v429 = vunpack.c.l.b16 %v301
        %v430 = vunpack.c.l.b16 %v302
        %v431 = vunpack.c.l.b16 %v303
        %v432 = vunpack.c.l.b16 %v304
        %v433 = vunpack.c.l.b16 %v305
        %v434 = vunpack.c.l.b16 %v306
        %v435 = vunpack.c.l.b16 %v307
        %v436 = vunpack.c.l.b16 %v308
        %v437 = vunpack.c.l.b16 %v309
        %v438 = vunpack.c.l.b16 %v310
        %v439 = vunpack.c.l.b16 %v311
        %v440 = vunpack.c.l.b16 %v312
        %v441 = vunpack.c.l.b16 %v313
        %v442 = vunpack.c.l.b16 %v314
        %v443 = vunpack.c.l.b16 %v315
        %v444 = vpack.c.b16 %v428, %v428
        %v445 = vpack.c.b16 %v429, %v429
        %v446 = vpack.c.b16 %v430, %v430
        %v447 = vpack.c.b16 %v431, %v431
        %v448 = vpack.c.b16 %v432, %v432
        %v449 = vpack.c.b16 %v433, %v433
        %v450 = vpack.c.b16 %v434, %v434
        %v451 = vpack.c.b16 %v435, %v435
        %v452 = vpack.c.b16 %v436, %v436
        %v453 = vpack.c.b16 %v437, %v437
        %v454 = vpack.c.b16 %v438, %v438
        %v455 = vpack.c.b16 %v439, %v439
        %v456 = vpack.c.b16 %v440, %v440
        %v457 = vpack.c.b16 %v441, %v441
        %v458 = vpack.c.b16 %v442, %v442
        %v459 = vpack.c.b16 %v443, %v443
        %vm460 = vsmask.f32 7424
        %v462 = vshrl.u32 %v396, 16
        %v464 = vshll.u32 %v396, 16
        %v466 = vrot.slane %v464, 1
        %v467 = vor.u32 %v462, %v466
        %v469 = vshll.u32 %v444, 16
        %v471 = vrot.slane %v469, 1
        %v472 = vsel %vm460, %v467, %v471
        %v474 = vshrl.u32 %v397, 16
        %v476 = vshll.u32 %v397, 16
        %v478 = vrot.slane %v476, 1
        %v479 = vor.u32 %v474, %v478
        %v481 = vshll.u32 %v445, 16
        %v483 = vrot.slane %v481, 1
        %v484 = vsel %vm460, %v479, %v483
        %v486 = vshrl.u32 %v398, 16
        %v488 = vshll.u32 %v398, 16
        %v490 = vrot.slane %v488, 1
        %v491 = vor.u32 %v486, %v490
        %v493 = vshll.u32 %v446, 16
        %v495 = vrot.slane %v493, 1
        %v496 = vsel %vm460, %v491, %v495
        %v498 = vshrl.u32 %v399, 16
        %v500 = vshll.u32 %v399, 16
        %v502 = vrot.slane %v500, 1
        %v503 = vor.u32 %v498, %v502
        %v505 = vshll.u32 %v447, 16
        %v507 = vrot.slane %v505, 1
        %v508 = vsel %vm460, %v503, %v507
        %v510 = vshrl.u32 %v400, 16
        %v512 = vshll.u32 %v400, 16
        %v514 = vrot.slane %v512, 1
        %v515 = vor.u32 %v510, %v514
        %v517 = vshll.u32 %v448, 16
        %v519 = vrot.slane %v517, 1
        %v520 = vsel %vm460, %v515, %v519
        %v522 = vshrl.u32 %v401, 16
        %v524 = vshll.u32 %v401, 16
        %v526 = vrot.slane %v524, 1
        %v527 = vor.u32 %v522, %v526
        %v529 = vshll.u32 %v449, 16
        %v531 = vrot.slane %v529, 1
        %v532 = vsel %vm460, %v527, %v531
        %v534 = vshrl.u32 %v402, 16
        %v536 = vshll.u32 %v402, 16
        %v538 = vrot.slane %v536, 1
        %v539 = vor.u32 %v534, %v538
        %v541 = vshll.u32 %v450, 16
        %v543 = vrot.slane %v541, 1
        %v544 = vsel %vm460, %v539, %v543
        %v546 = vshrl.u32 %v403, 16
        %v548 = vshll.u32 %v403, 16
        %v550 = vrot.slane %v548, 1
        %v551 = vor.u32 %v546, %v550
        %v553 = vshll.u32 %v451, 16
        %v555 = vrot.slane %v553, 1
        %v556 = vsel %vm460, %v551, %v555
        %v558 = vshrl.u32 %v404, 16
        %v560 = vshll.u32 %v404, 16
        %v562 = vrot.slane %v560, 1
        %v563 = vor.u32 %v558, %v562
        %v565 = vshll.u32 %v452, 16
        %v567 = vrot.slane %v565, 1
        %v568 = vsel %vm460, %v563, %v567
        %v570 = vshrl.u32 %v405, 16
        %v572 = vshll.u32 %v405, 16
        %v574 = vrot.slane %v572, 1
        %v575 = vor.u32 %v570, %v574
        %v577 = vshll.u32 %v453, 16
        %v579 = vrot.slane %v577, 1
        %v580 = vsel %vm460, %v575, %v579
        %v582 = vshrl.u32 %v406, 16
        %v584 = vshll.u32 %v406, 16
        %v586 = vrot.slane %v584, 1
        %v587 = vor.u32 %v582, %v586
        %v589 = vshll.u32 %v454, 16
        %v591 = vrot.slane %v589, 1
        %v592 = vsel %vm460, %v587, %v591
        %v594 = vshrl.u32 %v407, 16
        %v596 = vshll.u32 %v407, 16
        %v598 = vrot.slane %v596, 1
        %v599 = vor.u32 %v594, %v598
        %v601 = vshll.u32 %v455, 16
        %v603 = vrot.slane %v601, 1
        %v604 = vsel %vm460, %v599, %v603
        %v606 = vshrl.u32 %v408, 16
        %v608 = vshll.u32 %v408, 16
        %v610 = vrot.slane %v608, 1
        %v611 = vor.u32 %v606, %v610
        %v613 = vshll.u32 %v456, 16
        %v615 = vrot.slane %v613, 1
        %v616 = vsel %vm460, %v611, %v615
        %v618 = vshrl.u32 %v409, 16
        %v620 = vshll.u32 %v409, 16
        %v622 = vrot.slane %v620, 1
        %v623 = vor.u32 %v618, %v622
        %v625 = vshll.u32 %v457, 16
        %v627 = vrot.slane %v625, 1
        %v628 = vsel %vm460, %v623, %v627
        %v630 = vshrl.u32 %v410, 16
        %v632 = vshll.u32 %v410, 16
        %v634 = vrot.slane %v632, 1
        %v635 = vor.u32 %v630, %v634
        %v637 = vshll.u32 %v458, 16
        %v639 = vrot.slane %v637, 1
        %v640 = vsel %vm460, %v635, %v639
        %v642 = vshrl.u32 %v411, 16
        %v644 = vshll.u32 %v411, 16
        %v646 = vrot.slane %v644, 1
        %v647 = vor.u32 %v642, %v646
        %v649 = vshll.u32 %v459, 16
        %v651 = vrot.slane %v649, 1
        %v652 = vsel %vm460, %v647, %v651
        %653 = vrot.lane.b32.xlu0 %v472, 4
        %v654 = vpop.permute.xlu0 %653
        %655 = vrot.lane.b32.xlu0 %v484, 4
        %v656 = vpop.permute.xlu0 %655
        %657 = vrot.lane.b32.xlu0 %v496, 4
        %v658 = vpop.permute.xlu0 %657
        %659 = vrot.lane.b32.xlu0 %v508, 4
        %v660 = vpop.permute.xlu0 %659
        %661 = vrot.lane.b32.xlu0 %v520, 4
        %v662 = vpop.permute.xlu0 %661
        %663 = vrot.lane.b32.xlu0 %v532, 4
        %v664 = vpop.permute.xlu0 %663
        %665 = vrot.lane.b32.xlu0 %v544, 4
        %v666 = vpop.permute.xlu0 %665
        %667 = vrot.lane.b32.xlu0 %v556, 4
        %v668 = vpop.permute.xlu0 %667
        %669 = vrot.lane.b32.xlu0 %v568, 4
        %v670 = vpop.permute.xlu0 %669
        %671 = vrot.lane.b32.xlu0 %v580, 4
        %v672 = vpop.permute.xlu0 %671
        %673 = vrot.lane.b32.xlu0 %v592, 4
        %v674 = vpop.permute.xlu0 %673
        %675 = vrot.lane.b32.xlu0 %v604, 4
        %v676 = vpop.permute.xlu0 %675
        %677 = vrot.lane.b32.xlu0 %v616, 4
        %v678 = vpop.permute.xlu0 %677
        %679 = vrot.lane.b32.xlu0 %v628, 4
        %v680 = vpop.permute.xlu0 %679
        %681 = vrot.lane.b32.xlu0 %v640, 4
        %v682 = vpop.permute.xlu0 %681
        %683 = vrot.lane.b32.xlu0 %v652, 4
        %v684 = vpop.permute.xlu0 %683
        %v701 = vunpack.c.l.b16 %v316
        %v702 = vunpack.c.l.b16 %v317
        %v703 = vunpack.c.l.b16 %v318
        %v704 = vunpack.c.l.b16 %v319
        %v705 = vunpack.c.l.b16 %v320
        %v706 = vunpack.c.l.b16 %v321
        %v707 = vunpack.c.l.b16 %v322
        %v708 = vunpack.c.l.b16 %v323
        %v709 = vunpack.c.l.b16 %v324
        %v710 = vunpack.c.l.b16 %v325
        %v711 = vunpack.c.l.b16 %v326
        %v712 = vunpack.c.l.b16 %v327
        %v713 = vunpack.c.l.b16 %v328
        %v714 = vunpack.c.l.b16 %v329
        %v715 = vunpack.c.l.b16 %v330
        %v716 = vunpack.c.l.b16 %v331
        %v717 = vpack.c.b16 %v365, %v701
        %v718 = vpack.c.b16 %v367, %v702
        %v719 = vpack.c.b16 %v369, %v703
        %v720 = vpack.c.b16 %v371, %v704
        %v721 = vpack.c.b16 %v373, %v705
        %v722 = vpack.c.b16 %v375, %v706
        %v723 = vpack.c.b16 %v377, %v707
        %v724 = vpack.c.b16 %v379, %v708
        %v725 = vpack.c.b16 %v381, %v709
        %v726 = vpack.c.b16 %v383, %v710
        %v727 = vpack.c.b16 %v385, %v711
        %v728 = vpack.c.b16 %v387, %v712
        %v729 = vpack.c.b16 %v389, %v713
        %v730 = vpack.c.b16 %v391, %v714
        %v731 = vpack.c.b16 %v393, %v715
        %v732 = vpack.c.b16 %v395, %v716
        %vm733 = vcmask 1046528
        %v734 = vrot.slane %v717, 1
        %v735 = vrot.slane %v444, 1
        %v736 = vsel %vm733, %v734, %v735
        %v737 = vrot.slane %v718, 1
        %v738 = vrot.slane %v445, 1
        %v739 = vsel %vm733, %v737, %v738
        %v740 = vrot.slane %v719, 1
        %v741 = vrot.slane %v446, 1
        %v742 = vsel %vm733, %v740, %v741
        %v743 = vrot.slane %v720, 1
        %v744 = vrot.slane %v447, 1
        %v745 = vsel %vm733, %v743, %v744
        %v746 = vrot.slane %v721, 1
        %v747 = vrot.slane %v448, 1
        %v748 = vsel %vm733, %v746, %v747
        %v749 = vrot.slane %v722, 1
        %v750 = vrot.slane %v449, 1
        %v751 = vsel %vm733, %v749, %v750
        %v752 = vrot.slane %v723, 1
        %v753 = vrot.slane %v450, 1
        %v754 = vsel %vm733, %v752, %v753
        %v755 = vrot.slane %v724, 1
        %v756 = vrot.slane %v451, 1
        %v757 = vsel %vm733, %v755, %v756
        %v758 = vrot.slane %v725, 1
        %v759 = vrot.slane %v452, 1
        %v760 = vsel %vm733, %v758, %v759
        %v761 = vrot.slane %v726, 1
        %v762 = vrot.slane %v453, 1
        %v763 = vsel %vm733, %v761, %v762
        %v764 = vrot.slane %v727, 1
        %v765 = vrot.slane %v454, 1
        %v766 = vsel %vm733, %v764, %v765
        %v767 = vrot.slane %v728, 1
        %v768 = vrot.slane %v455, 1
        %v769 = vsel %vm733, %v767, %v768
        %v770 = vrot.slane %v729, 1
        %v771 = vrot.slane %v456, 1
        %v772 = vsel %vm733, %v770, %v771
        %v773 = vrot.slane %v730, 1
        %v774 = vrot.slane %v457, 1
        %v775 = vsel %vm733, %v773, %v774
        %v776 = vrot.slane %v731, 1
        %v777 = vrot.slane %v458, 1
        %v778 = vsel %vm733, %v776, %v777
        %v779 = vrot.slane %v732, 1
        %v780 = vrot.slane %v459, 1
        %v781 = vsel %vm733, %v779, %v780
        %782 = vrot.lane.b32.xlu0 %v736, 8
        %v783 = vpop.permute.xlu0 %782
        %784 = vrot.lane.b32.xlu0 %v739, 8
        %v785 = vpop.permute.xlu0 %784
        %786 = vrot.lane.b32.xlu0 %v742, 8
        %v787 = vpop.permute.xlu0 %786
        %788 = vrot.lane.b32.xlu0 %v745, 8
        %v789 = vpop.permute.xlu0 %788
        %790 = vrot.lane.b32.xlu0 %v748, 8
        %v791 = vpop.permute.xlu0 %790
        %792 = vrot.lane.b32.xlu0 %v751, 8
        %v793 = vpop.permute.xlu0 %792
        %794 = vrot.lane.b32.xlu0 %v754, 8
        %v795 = vpop.permute.xlu0 %794
        %796 = vrot.lane.b32.xlu0 %v757, 8
        %v797 = vpop.permute.xlu0 %796
        %798 = vrot.lane.b32.xlu0 %v760, 8
        %v799 = vpop.permute.xlu0 %798
        %800 = vrot.lane.b32.xlu0 %v763, 8
        %v801 = vpop.permute.xlu0 %800
        %802 = vrot.lane.b32.xlu0 %v766, 8
        %v803 = vpop.permute.xlu0 %802
        %804 = vrot.lane.b32.xlu0 %v769, 8
        %v805 = vpop.permute.xlu0 %804
        %806 = vrot.lane.b32.xlu0 %v772, 8
        %v807 = vpop.permute.xlu0 %806
        %808 = vrot.lane.b32.xlu0 %v775, 8
        %v809 = vpop.permute.xlu0 %808
        %810 = vrot.lane.b32.xlu0 %v778, 8
        %v811 = vpop.permute.xlu0 %810
        %812 = vrot.lane.b32.xlu0 %v781, 8
        %v813 = vpop.permute.xlu0 %812
        %vm814 = vcmask 31744
        %v816 = vsel %vm814, %v396, %v654
        %v818 = vsel %vm814, %v397, %v656
        %v820 = vsel %vm814, %v398, %v658
        %v822 = vsel %vm814, %v399, %v660
        %v824 = vsel %vm814, %v400, %v662
        %v826 = vsel %vm814, %v401, %v664
        %v828 = vsel %vm814, %v402, %v666
        %v830 = vsel %vm814, %v403, %v668
        %v832 = vsel %vm814, %v404, %v670
        %v834 = vsel %vm814, %v405, %v672
        %v836 = vsel %vm814, %v406, %v674
        %v838 = vsel %vm814, %v407, %v676
        %v840 = vsel %vm814, %v408, %v678
        %v842 = vsel %vm814, %v409, %v680
        %v844 = vsel %vm814, %v410, %v682
        %v846 = vsel %vm814, %v411, %v684
        %vm847 = vcmask 64512
        %v849 = vsel %vm847, %v816, %v783
        %v851 = vsel %vm847, %v818, %v785
        %v853 = vsel %vm847, %v820, %v787
        %v855 = vsel %vm847, %v822, %v789
        %v857 = vsel %vm847, %v824, %v791
        %v859 = vsel %vm847, %v826, %v793
        %v861 = vsel %vm847, %v828, %v795
        %v863 = vsel %vm847, %v830, %v797
        %v865 = vsel %vm847, %v832, %v799
        %v867 = vsel %vm847, %v834, %v801
        %v869 = vsel %vm847, %v836, %v803
        %v871 = vsel %vm847, %v838, %v805
        %v873 = vsel %vm847, %v840, %v807
        %v875 = vsel %vm847, %v842, %v809
        %v877 = vsel %vm847, %v844, %v811
        %v879 = vsel %vm847, %v846, %v813
        %v880 = vld [vmem:[#allocation2] sm:$0xff]
        %v881 = vld [vmem:[#allocation2 + $0x8] sm:$0xff]
        %v882 = vld [vmem:[#allocation2 + $0x10] sm:$0xff]
        %v883 = vld [vmem:[#allocation2 + $0x18] sm:$0xff]
        %v884 = vld [vmem:[#allocation2 + $0x20] sm:$0xff]
        %v885 = vld [vmem:[#allocation2 + $0x28] sm:$0xff]
        %v886 = vld [vmem:[#allocation2 + $0x30] sm:$0xff]
        %v887 = vld [vmem:[#allocation2 + $0x38] sm:$0xff]
        %v888 = vld [vmem:[#allocation2 + $0x40] sm:$0xff]
        %v889 = vld [vmem:[#allocation2 + $0x48] sm:$0xff]
        %v890 = vld [vmem:[#allocation2 + $0x50] sm:$0xff]
        %v891 = vld [vmem:[#allocation2 + $0x58] sm:$0xff]
        %v892 = vld [vmem:[#allocation2 + $0x60] sm:$0xff]
        %v893 = vld [vmem:[#allocation2 + $0x68] sm:$0xff]
        %v894 = vld [vmem:[#allocation2 + $0x70] sm:$0xff]
        %v895 = vld [vmem:[#allocation2 + $0x78] sm:$0xff]
        %v896 = vld [vmem:[#allocation2 + $0x80] sm:$0xff]
        %v897 = vld [vmem:[#allocation2 + $0x88] sm:$0xff]
        %v898 = vld [vmem:[#allocation2 + $0x90] sm:$0xff]
        %v899 = vld [vmem:[#allocation2 + $0x98] sm:$0xff]
        %v900 = vld [vmem:[#allocation2 + $0xa0] sm:$0xff]
        %v901 = vld [vmem:[#allocation2 + $0xa8] sm:$0xff]
        %v902 = vld [vmem:[#allocation2 + $0xb0] sm:$0xff]
        %v903 = vld [vmem:[#allocation2 + $0xb8] sm:$0xff]
        %v904 = vld [vmem:[#allocation2 + $0xc0] sm:$0xff]
        %v905 = vld [vmem:[#allocation2 + $0xc8] sm:$0xff]
        %v906 = vld [vmem:[#allocation2 + $0xd0] sm:$0xff]
        %v907 = vld [vmem:[#allocation2 + $0xd8] sm:$0xff]
        %v908 = vld [vmem:[#allocation2 + $0xe0] sm:$0xff]
        %v909 = vld [vmem:[#allocation2 + $0xe8] sm:$0xff]
        %v910 = vld [vmem:[#allocation2 + $0xf0] sm:$0xff]
        %v911 = vld [vmem:[#allocation2 + $0xf8] sm:$0xff]
        %v912 = vld [vmem:[%s219] sm:$0xf]
        %v913 = vld [vmem:[%s219 + $0x4] sm:$0x3]
        %v916 = vunpack.c.l.b16 %v912
        %v917 = vunpack.c.l.b16 %v913
        %v918 = vpack.c.b16 %v917, %v916
        %vm919 = vcmask 97280
        %v920 = vsel %vm919, %v849, 0
        %v922 = vsel %vm919, %v851, 0
        %v924 = vsel %vm919, %v853, 0
        %v926 = vsel %vm919, %v855, 0
        %v928 = vsel %vm919, %v857, 0
        %v930 = vsel %vm919, %v859, 0
        %v932 = vsel %vm919, %v861, 0
        %v934 = vsel %vm919, %v863, 0
        %v936 = vsel %vm919, %v865, 0
        %v938 = vsel %vm919, %v867, 0
        %v940 = vsel %vm919, %v869, 0
        %v942 = vsel %vm919, %v871, 0
        %v944 = vsel %vm919, %v873, 0
        %v946 = vsel %vm919, %v875, 0
        %v948 = vsel %vm919, %v877, 0
        %v950 = vsel %vm919, %v879, 0
        %vm952 = vcmask 1045504
        %v954 = vsel %vm952, %v918, 0
        %956 = vmatprep.subr.bf16.mxu0 0
        %957 = vmatpush1.bf16.msra.mxu0 %v954
        %958 = vmatprep.subr.bf16.mxu0 0
        %959 = vmatpush1.bf16.msra.mxu0 0
        %960 = vmatprep.subr.bf16.mxu0 0
        %961 = vmatpush1.bf16.msra.mxu0 0
        %962 = vmatprep.subr.bf16.mxu0 0
        %963 = vmatpush1.bf16.msra.mxu0 0
        %964 = vmatprep.subr.bf16.mxu0 0
        %965 = vmatpush1.bf16.msra.mxu0 0
        %966 = vmatprep.subr.bf16.mxu0 0
        %967 = vmatpush1.bf16.msra.mxu0 0
        %968 = vmatprep.subr.bf16.mxu0 0
        %969 = vmatpush1.bf16.msra.mxu0 0
        %970 = vmatprep.subr.bf16.mxu0 0
        %971 = vmatpush1.bf16.msra.mxu0 0
        %972 = vmatprep.subr.bf16.mxu0 0
        %973 = vmatpush1.bf16.msra.mxu0 0
        %974 = vmatprep.subr.bf16.mxu0 0
        %975 = vmatpush1.bf16.msra.mxu0 0
        %976 = vmatprep.subr.bf16.mxu0 0
        %977 = vmatpush1.bf16.msra.mxu0 0
        %978 = vmatprep.subr.bf16.mxu0 0
        %979 = vmatpush1.bf16.msra.mxu0 0
        %980 = vmatprep.subr.bf16.mxu0 0
        %981 = vmatpush1.bf16.msra.mxu0 0
        %982 = vmatprep.subr.bf16.mxu0 0
        %983 = vmatpush1.bf16.msra.mxu0 0
        %984 = vmatprep.subr.bf16.mxu0 0
        %985 = vmatpush1.bf16.msra.mxu0 0
        %986 = vmatprep.subr.bf16.mxu0 0
        %987 = vmatpush1.bf16.msra.mxu0 0
        %988 = vmatprep.mubr.bf16.mxu0 0
        %989 = vmatmul.mubr.bf16.gmra.mrb[0].mxu0 %v920
        %v990 = vpop.f32.mrb[0].mxu0
        %v991 = vadd.f32 0.0, %v990
        %v992 = vpop.f32.mrb[0].mxu0
        %v993 = vpop.f32.mrb[0].mxu0
        %v994 = vadd.f32 0.0, %v993
        %v995 = vpop.f32.mrb[0].mxu0
        %996 = vmatprep.mubr.bf16.mxu0 0
        %997 = vmatmul.mubr.bf16.gmra.mrb[0].mxu0 %v922
        %v998 = vpop.f32.mrb[0].mxu0
        %v999 = vadd.f32 0.0, %v998
        %v1000 = vpop.f32.mrb[0].mxu0
        %v1001 = vpop.f32.mrb[0].mxu0
        %v1002 = vadd.f32 0.0, %v1001
        %v1003 = vpop.f32.mrb[0].mxu0
        %1004 = vmatprep.mubr.bf16.mxu0 0
        %1005 = vmatmul.mubr.bf16.gmra.mrb[0].mxu0 %v924
        %v1006 = vpop.f32.mrb[0].mxu0
        %v1007 = vadd.f32 0.0, %v1006
        %v1008 = vpop.f32.mrb[0].mxu0
        %v1009 = vpop.f32.mrb[0].mxu0
        %v1010 = vadd.f32 0.0, %v1009
        %v1011 = vpop.f32.mrb[0].mxu0
        %1012 = vmatprep.mubr.bf16.mxu0 0
        %1013 = vmatmul.mubr.bf16.gmra.mrb[0].mxu0 %v926
        %v1014 = vpop.f32.mrb[0].mxu0
        %v1015 = vadd.f32 0.0, %v1014
        %v1016 = vpop.f32.mrb[0].mxu0
        %v1017 = vpop.f32.mrb[0].mxu0
        %v1018 = vadd.f32 0.0, %v1017
        %v1019 = vpop.f32.mrb[0].mxu0
        %1020 = vmatprep.mubr.bf16.mxu0 0
        %1021 = vmatmul.mubr.bf16.gmra.mrb[0].mxu0 %v928
        %v1022 = vpop.f32.mrb[0].mxu0
        %v1023 = vadd.f32 0.0, %v1022
        %v1024 = vpop.f32.mrb[0].mxu0
        %v1025 = vpop.f32.mrb[0].mxu0
        %v1026 = vadd.f32 0.0, %v1025
        %v1027 = vpop.f32.mrb[0].mxu0
        %1028 = vmatprep.mubr.bf16.mxu0 0
        %1029 = vmatmul.mubr.bf16.gmra.mrb[0].mxu0 %v930
        %v1030 = vpop.f32.mrb[0].mxu0
        %v1031 = vadd.f32 0.0, %v1030
        %v1032 = vpop.f32.mrb[0].mxu0
        %v1033 = vpop.f32.mrb[0].mxu0
        %v1034 = vadd.f32 0.0, %v1033
        %v1035 = vpop.f32.mrb[0].mxu0
        %1036 = vmatprep.mubr.bf16.mxu0 0
        %1037 = vmatmul.mubr.bf16.gmra.mrb[0].mxu0 %v932
        %v1038 = vpop.f32.mrb[0].mxu0
        %v1039 = vadd.f32 0.0, %v1038
        %v1040 = vpop.f32.mrb[0].mxu0
        %v1041 = vpop.f32.mrb[0].mxu0
        %v1042 = vadd.f32 0.0, %v1041
        %v1043 = vpop.f32.mrb[0].mxu0
        %1044 = vmatprep.mubr.bf16.mxu0 0
        %1045 = vmatmul.mubr.bf16.gmra.mrb[0].mxu0 %v934
        %v1046 = vpop.f32.mrb[0].mxu0
        %v1047 = vadd.f32 0.0, %v1046
        %v1048 = vpop.f32.mrb[0].mxu0
        %v1049 = vpop.f32.mrb[0].mxu0
        %v1050 = vadd.f32 0.0, %v1049
        %v1051 = vpop.f32.mrb[0].mxu0
        %1052 = vmatprep.mubr.bf16.mxu0 0
        %1053 = vmatmul.mubr.bf16.gmra.mrb[0].mxu0 %v936
        %v1054 = vpop.f32.mrb[0].mxu0
        %v1055 = vadd.f32 0.0, %v1054
        %v1056 = vpop.f32.mrb[0].mxu0
        %v1057 = vpop.f32.mrb[0].mxu0
        %v1058 = vadd.f32 0.0, %v1057
        %v1059 = vpop.f32.mrb[0].mxu0
        %1060 = vmatprep.mubr.bf16.mxu0 0
        %1061 = vmatmul.mubr.bf16.gmra.mrb[0].mxu0 %v938
        %v1062 = vpop.f32.mrb[0].mxu0
        %v1063 = vadd.f32 0.0, %v1062
        %v1064 = vpop.f32.mrb[0].mxu0
        %v1065 = vpop.f32.mrb[0].mxu0
        %v1066 = vadd.f32 0.0, %v1065
        %v1067 = vpop.f32.mrb[0].mxu0
        %1068 = vmatprep.mubr.bf16.mxu0 0
        %1069 = vmatmul.mubr.bf16.gmra.mrb[0].mxu0 %v940
        %v1070 = vpop.f32.mrb[0].mxu0
        %v1071 = vadd.f32 0.0, %v1070
        %v1072 = vpop.f32.mrb[0].mxu0
        %v1073 = vpop.f32.mrb[0].mxu0
        %v1074 = vadd.f32 0.0, %v1073
        %v1075 = vpop.f32.mrb[0].mxu0
        %1076 = vmatprep.mubr.bf16.mxu0 0
        %1077 = vmatmul.mubr.bf16.gmra.mrb[0].mxu0 %v942
        %v1078 = vpop.f32.mrb[0].mxu0
        %v1079 = vadd.f32 0.0, %v1078
        %v1080 = vpop.f32.mrb[0].mxu0
        %v1081 = vpop.f32.mrb[0].mxu0
        %v1082 = vadd.f32 0.0, %v1081
        %v1083 = vpop.f32.mrb[0].mxu0
        %1084 = vmatprep.mubr.bf16.mxu0 0
        %1085 = vmatmul.mubr.bf16.gmra.mrb[0].mxu0 %v944
        %v1086 = vpop.f32.mrb[0].mxu0
        %v1087 = vadd.f32 0.0, %v1086
        %v1088 = vpop.f32.mrb[0].mxu0
        %v1089 = vpop.f32.mrb[0].mxu0
        %v1090 = vadd.f32 0.0, %v1089
        %v1091 = vpop.f32.mrb[0].mxu0
        %1092 = vmatprep.mubr.bf16.mxu0 0
        %1093 = vmatmul.mubr.bf16.gmra.mrb[0].mxu0 %v946
        %v1094 = vpop.f32.mrb[0].mxu0
        %v1095 = vadd.f32 0.0, %v1094
        %v1096 = vpop.f32.mrb[0].mxu0
        %v1097 = vpop.f32.mrb[0].mxu0
        %v1098 = vadd.f32 0.0, %v1097
        %v1099 = vpop.f32.mrb[0].mxu0
        %1100 = vmatprep.mubr.bf16.mxu0 0
        %1101 = vmatmul.mubr.bf16.gmra.mrb[0].mxu0 %v948
        %v1102 = vpop.f32.mrb[0].mxu0
        %v1103 = vadd.f32 0.0, %v1102
        %v1104 = vpop.f32.mrb[0].mxu0
        %v1105 = vpop.f32.mrb[0].mxu0
        %v1106 = vadd.f32 0.0, %v1105
        %v1107 = vpop.f32.mrb[0].mxu0
        %1108 = vmatprep.mubr.bf16.mxu0 0
        %1109 = vmatmul.mubr.bf16.gmra.mrb[0].mxu0 %v950
        %v1110 = vpop.f32.mrb[0].mxu0
        %v1111 = vadd.f32 0.0, %v1110
        %v1112 = vpop.f32.mrb[0].mxu0
        %v1113 = vpop.f32.mrb[0].mxu0
        %v1114 = vadd.f32 0.0, %v1113
        %v1115 = vpop.f32.mrb[0].mxu0
        %1116 = vdwg.mxu0
        %v1117 = vadd.f32 %v880, %v991
        %v1118 = vadd.f32 %v881, %v994
        %v1119 = vadd.f32 %v882, %v999
        %v1120 = vadd.f32 %v883, %v1002
        %v1121 = vadd.f32 %v884, %v1007
        %v1122 = vadd.f32 %v885, %v1010
        %v1123 = vadd.f32 %v886, %v1015
        %v1124 = vadd.f32 %v887, %v1018
        %v1125 = vadd.f32 %v888, %v1023
        %v1126 = vadd.f32 %v889, %v1026
        %v1127 = vadd.f32 %v890, %v1031
        %v1128 = vadd.f32 %v891, %v1034
        %v1129 = vadd.f32 %v892, %v1039
        %v1130 = vadd.f32 %v893, %v1042
        %v1131 = vadd.f32 %v894, %v1047
        %v1132 = vadd.f32 %v895, %v1050
        %v1133 = vadd.f32 %v896, %v1055
        %v1134 = vadd.f32 %v897, %v1058
        %v1135 = vadd.f32 %v898, %v1063
        %v1136 = vadd.f32 %v899, %v1066
        %v1137 = vadd.f32 %v900, %v1071
        %v1138 = vadd.f32 %v901, %v1074
        %v1139 = vadd.f32 %v902, %v1079
        %v1140 = vadd.f32 %v903, %v1082
        %v1141 = vadd.f32 %v904, %v1087
        %v1142 = vadd.f32 %v905, %v1090
        %v1143 = vadd.f32 %v906, %v1095
        %v1144 = vadd.f32 %v907, %v1098
        %v1145 = vadd.f32 %v908, %v1103
        %v1146 = vadd.f32 %v909, %v1106
        %v1147 = vadd.f32 %v910, %v1111
        %v1148 = vadd.f32 %v911, %v1114
        %1149 = vst [vmem:[#allocation2] sm:$0xff] %v1117
        %1150 = vst [vmem:[#allocation2 + $0x8] sm:$0xff] %v1118
        %1151 = vst [vmem:[#allocation2 + $0x10] sm:$0xff] %v1119
        %1152 = vst [vmem:[#allocation2 + $0x18] sm:$0xff] %v1120
        %1153 = vst [vmem:[#allocation2 + $0x20] sm:$0xff] %v1121
        %1154 = vst [vmem:[#allocation2 + $0x28] sm:$0xff] %v1122
        %1155 = vst [vmem:[#allocation2 + $0x30] sm:$0xff] %v1123
        %1156 = vst [vmem:[#allocation2 + $0x38] sm:$0xff] %v1124
        %1157 = vst [vmem:[#allocation2 + $0x40] sm:$0xff] %v1125
        %1158 = vst [vmem:[#allocation2 + $0x48] sm:$0xff] %v1126
        %1159 = vst [vmem:[#allocation2 + $0x50] sm:$0xff] %v1127
        %1160 = vst [vmem:[#allocation2 + $0x58] sm:$0xff] %v1128
        %1161 = vst [vmem:[#allocation2 + $0x60] sm:$0xff] %v1129
        %1162 = vst [vmem:[#allocation2 + $0x68] sm:$0xff] %v1130
        %1163 = vst [vmem:[#allocation2 + $0x70] sm:$0xff] %v1131
        %1164 = vst [vmem:[#allocation2 + $0x78] sm:$0xff] %v1132
        %1165 = vst [vmem:[#allocation2 + $0x80] sm:$0xff] %v1133
        %1166 = vst [vmem:[#allocation2 + $0x88] sm:$0xff] %v1134
        %1167 = vst [vmem:[#allocation2 + $0x90] sm:$0xff] %v1135
        %1168 = vst [vmem:[#allocation2 + $0x98] sm:$0xff] %v1136
        %1169 = vst [vmem:[#allocation2 + $0xa0] sm:$0xff] %v1137
        %1170 = vst [vmem:[#allocation2 + $0xa8] sm:$0xff] %v1138
        %1171 = vst [vmem:[#allocation2 + $0xb0] sm:$0xff] %v1139
        %1172 = vst [vmem:[#allocation2 + $0xb8] sm:$0xff] %v1140
        %1173 = vst [vmem:[#allocation2 + $0xc0] sm:$0xff] %v1141
        %1174 = vst [vmem:[#allocation2 + $0xc8] sm:$0xff] %v1142
        %1175 = vst [vmem:[#allocation2 + $0xd0] sm:$0xff] %v1143
        %1176 = vst [vmem:[#allocation2 + $0xd8] sm:$0xff] %v1144
        %1177 = vst [vmem:[#allocation2 + $0xe0] sm:$0xff] %v1145
        %1178 = vst [vmem:[#allocation2 + $0xe8] sm:$0xff] %v1146
        %1179 = vst [vmem:[#allocation2 + $0xf0] sm:$0xff] %v1147
        %1180 = vst [vmem:[#allocation2 + $0xf8] sm:$0xff] %v1148
        %s1181 = sadd.s32 %s225, 1
        %s1182 = smul.u32 %s1181, 3
        %s1183 = smul.addr %s1182, 4
        %s1184 = scalar_lea.vmem %s215, %s1183
        %v1185 = vld [vmem:[%s1184] sm:$0xf]
        %v1186 = vld [vmem:[%s1184 + $0x4] sm:$0xf]
        %v1187 = vld [vmem:[%s1184 + $0xc] sm:$0xf]
        %v1188 = vld [vmem:[%s1184 + $0x10] sm:$0xf]
        %v1189 = vld [vmem:[%s1184 + $0x18] sm:$0xf]
        %v1190 = vld [vmem:[%s1184 + $0x1c] sm:$0xf]
        %v1191 = vld [vmem:[%s1184 + $0x24] sm:$0xf]
        %v1192 = vld [vmem:[%s1184 + $0x28] sm:$0xf]
        %v1193 = vld [vmem:[%s1184 + $0x30] sm:$0xf]
        %v1194 = vld [vmem:[%s1184 + $0x34] sm:$0xf]
        %v1195 = vld [vmem:[%s1184 + $0x3c] sm:$0xf]
        %v1196 = vld [vmem:[%s1184 + $0x40] sm:$0xf]
        %v1197 = vld [vmem:[%s1184 + $0x48] sm:$0xf]
        %v1198 = vld [vmem:[%s1184 + $0x4c] sm:$0xf]
        %v1199 = vld [vmem:[%s1184 + $0x54] sm:$0xf]
        %v1200 = vld [vmem:[%s1184 + $0x58] sm:$0xf]
        %v1201 = vld [vmem:[%s1184 + $0x60] sm:$0xf]
        %v1202 = vld [vmem:[%s1184 + $0x64] sm:$0xf]
        %v1203 = vld [vmem:[%s1184 + $0x6c] sm:$0xf]
        %v1204 = vld [vmem:[%s1184 + $0x70] sm:$0xf]
        %v1205 = vld [vmem:[%s1184 + $0x78] sm:$0xf]
        %v1206 = vld [vmem:[%s1184 + $0x7c] sm:$0xf]
        %v1207 = vld [vmem:[%s1184 + $0x84] sm:$0xf]
        %v1208 = vld [vmem:[%s1184 + $0x88] sm:$0xf]
        %v1209 = vld [vmem:[%s1184 + $0x90] sm:$0xf]
        %v1210 = vld [vmem:[%s1184 + $0x94] sm:$0xf]
        %v1211 = vld [vmem:[%s1184 + $0x9c] sm:$0xf]
        %v1212 = vld [vmem:[%s1184 + $0xa0] sm:$0xf]
        %v1213 = vld [vmem:[%s1184 + $0xa8] sm:$0xf]
        %v1214 = vld [vmem:[%s1184 + $0xac] sm:$0xf]
        %v1215 = vld [vmem:[%s1184 + $0xb4] sm:$0xf]
        %v1216 = vld [vmem:[%s1184 + $0xb8] sm:$0xf]
        %v1217 = vld [vmem:[%s1184 + $0x8] sm:$0x1]
        %v1218 = vld [vmem:[%s1184 + $0x14] sm:$0x1]
        %v1219 = vld [vmem:[%s1184 + $0x20] sm:$0x1]
        %v1220 = vld [vmem:[%s1184 + $0x2c] sm:$0x1]
        %v1221 = vld [vmem:[%s1184 + $0x38] sm:$0x1]
        %v1222 = vld [vmem:[%s1184 + $0x44] sm:$0x1]
        %v1223 = vld [vmem:[%s1184 + $0x50] sm:$0x1]
        %v1224 = vld [vmem:[%s1184 + $0x5c] sm:$0x1]
        %v1225 = vld [vmem:[%s1184 + $0x68] sm:$0x1]
        %v1226 = vld [vmem:[%s1184 + $0x74] sm:$0x1]
        %v1227 = vld [vmem:[%s1184 + $0x80] sm:$0x1]
        %v1228 = vld [vmem:[%s1184 + $0x8c] sm:$0x1]
        %v1229 = vld [vmem:[%s1184 + $0x98] sm:$0x1]
        %v1230 = vld [vmem:[%s1184 + $0xa4] sm:$0x1]
        %v1231 = vld [vmem:[%s1184 + $0xb0] sm:$0x1]
        %v1232 = vld [vmem:[%s1184 + $0xbc] sm:$0x1]
        %v1233 = vld [vmem:[%s1184] sm:$0xe]
        %v1234 = vld [vmem:[%s1184 + $0xc] sm:$0xe]
        %v1235 = vld [vmem:[%s1184 + $0x18] sm:$0xe]
        %v1236 = vld [vmem:[%s1184 + $0x24] sm:$0xe]
        %v1237 = vld [vmem:[%s1184 + $0x30] sm:$0xe]
        %v1238 = vld [vmem:[%s1184 + $0x3c] sm:$0xe]
        %v1239 = vld [vmem:[%s1184 + $0x48] sm:$0xe]
        %v1240 = vld [vmem:[%s1184 + $0x54] sm:$0xe]
        %v1241 = vld [vmem:[%s1184 + $0x60] sm:$0xe]
        %v1242 = vld [vmem:[%s1184 + $0x6c] sm:$0xe]
        %v1243 = vld [vmem:[%s1184 + $0x78] sm:$0xe]
        %v1244 = vld [vmem:[%s1184 + $0x84] sm:$0xe]
        %v1245 = vld [vmem:[%s1184 + $0x90] sm:$0xe]
        %v1246 = vld [vmem:[%s1184 + $0x9c] sm:$0xe]
        %v1247 = vld [vmem:[%s1184 + $0xa8] sm:$0xe]
        %v1248 = vld [vmem:[%s1184 + $0xb4] sm:$0xe]
        %v1281 = vunpack.c.l.b16 %v1185
        %v1282 = vunpack.c.l.b16 %v1186
        %v1283 = vunpack.c.l.b16 %v1187
        %v1284 = vunpack.c.l.b16 %v1188
        %v1285 = vunpack.c.l.b16 %v1189
        %v1286 = vunpack.c.l.b16 %v1190
        %v1287 = vunpack.c.l.b16 %v1191
        %v1288 = vunpack.c.l.b16 %v1192
        %v1289 = vunpack.c.l.b16 %v1193
        %v1290 = vunpack.c.l.b16 %v1194
        %v1291 = vunpack.c.l.b16 %v1195
        %v1292 = vunpack.c.l.b16 %v1196
        %v1293 = vunpack.c.l.b16 %v1197
        %v1294 = vunpack.c.l.b16 %v1198
        %v1295 = vunpack.c.l.b16 %v1199
        %v1296 = vunpack.c.l.b16 %v1200
        %v1297 = vunpack.c.l.b16 %v1201
        %v1298 = vunpack.c.l.b16 %v1202
        %v1299 = vunpack.c.l.b16 %v1203
        %v1300 = vunpack.c.l.b16 %v1204
        %v1301 = vunpack.c.l.b16 %v1205
        %v1302 = vunpack.c.l.b16 %v1206
        %v1303 = vunpack.c.l.b16 %v1207
        %v1304 = vunpack.c.l.b16 %v1208
        %v1305 = vunpack.c.l.b16 %v1209
        %v1306 = vunpack.c.l.b16 %v1210
        %v1307 = vunpack.c.l.b16 %v1211
        %v1308 = vunpack.c.l.b16 %v1212
        %v1309 = vunpack.c.l.b16 %v1213
        %v1310 = vunpack.c.l.b16 %v1214
        %v1311 = vunpack.c.l.b16 %v1215
        %v1312 = vunpack.c.l.b16 %v1216
        %v1313 = vpack.c.b16 %v1282, %v1281
        %v1314 = vpack.c.b16 %v1284, %v1283
        %v1315 = vpack.c.b16 %v1286, %v1285
        %v1316 = vpack.c.b16 %v1288, %v1287
        %v1317 = vpack.c.b16 %v1290, %v1289
        %v1318 = vpack.c.b16 %v1292, %v1291
        %v1319 = vpack.c.b16 %v1294, %v1293
        %v1320 = vpack.c.b16 %v1296, %v1295
        %v1321 = vpack.c.b16 %v1298, %v1297
        %v1322 = vpack.c.b16 %v1300, %v1299
        %v1323 = vpack.c.b16 %v1302, %v1301
        %v1324 = vpack.c.b16 %v1304, %v1303
        %v1325 = vpack.c.b16 %v1306, %v1305
        %v1326 = vpack.c.b16 %v1308, %v1307
        %v1327 = vpack.c.b16 %v1310, %v1309
        %v1328 = vpack.c.b16 %v1312, %v1311
        %v1345 = vunpack.c.l.b16 %v1217
        %v1346 = vunpack.c.l.b16 %v1218
        %v1347 = vunpack.c.l.b16 %v1219
        %v1348 = vunpack.c.l.b16 %v1220
        %v1349 = vunpack.c.l.b16 %v1221
        %v1350 = vunpack.c.l.b16 %v1222
        %v1351 = vunpack.c.l.b16 %v1223
        %v1352 = vunpack.c.l.b16 %v1224
        %v1353 = vunpack.c.l.b16 %v1225
        %v1354 = vunpack.c.l.b16 %v1226
        %v1355 = vunpack.c.l.b16 %v1227
        %v1356 = vunpack.c.l.b16 %v1228
        %v1357 = vunpack.c.l.b16 %v1229
        %v1358 = vunpack.c.l.b16 %v1230
        %v1359 = vunpack.c.l.b16 %v1231
        %v1360 = vunpack.c.l.b16 %v1232
        %v1361 = vpack.c.b16 %v1345, %v1345
        %v1362 = vpack.c.b16 %v1346, %v1346
        %v1363 = vpack.c.b16 %v1347, %v1347
        %v1364 = vpack.c.b16 %v1348, %v1348
        %v1365 = vpack.c.b16 %v1349, %v1349
        %v1366 = vpack.c.b16 %v1350, %v1350
        %v1367 = vpack.c.b16 %v1351, %v1351
        %v1368 = vpack.c.b16 %v1352, %v1352
        %v1369 = vpack.c.b16 %v1353, %v1353
        %v1370 = vpack.c.b16 %v1354, %v1354
        %v1371 = vpack.c.b16 %v1355, %v1355
        %v1372 = vpack.c.b16 %v1356, %v1356
        %v1373 = vpack.c.b16 %v1357, %v1357
        %v1374 = vpack.c.b16 %v1358, %v1358
        %v1375 = vpack.c.b16 %v1359, %v1359
        %v1376 = vpack.c.b16 %v1360, %v1360
        %v1378 = vshrl.u32 %v1313, 16
        %v1380 = vshll.u32 %v1313, 16
        %v1382 = vrot.slane %v1380, 1
        %v1383 = vor.u32 %v1378, %v1382
        %v1385 = vshll.u32 %v1361, 16
        %v1387 = vrot.slane %v1385, 1
        %v1388 = vsel %vm460, %v1383, %v1387
        %v1390 = vshrl.u32 %v1314, 16
        %v1392 = vshll.u32 %v1314, 16
        %v1394 = vrot.slane %v1392, 1
        %v1395 = vor.u32 %v1390, %v1394
        %v1397 = vshll.u32 %v1362, 16
        %v1399 = vrot.slane %v1397, 1
        %v1400 = vsel %vm460, %v1395, %v1399
        %v1402 = vshrl.u32 %v1315, 16
        %v1404 = vshll.u32 %v1315, 16
        %v1406 = vrot.slane %v1404, 1
        %v1407 = vor.u32 %v1402, %v1406
        %v1409 = vshll.u32 %v1363, 16
        %v1411 = vrot.slane %v1409, 1
        %v1412 = vsel %vm460, %v1407, %v1411
        %v1414 = vshrl.u32 %v1316, 16
        %v1416 = vshll.u32 %v1316, 16
        %v1418 = vrot.slane %v1416, 1
        %v1419 = vor.u32 %v1414, %v1418
        %v1421 = vshll.u32 %v1364, 16
        %v1423 = vrot.slane %v1421, 1
        %v1424 = vsel %vm460, %v1419, %v1423
        %v1426 = vshrl.u32 %v1317, 16
        %v1428 = vshll.u32 %v1317, 16
        %v1430 = vrot.slane %v1428, 1
        %v1431 = vor.u32 %v1426, %v1430
        %v1433 = vshll.u32 %v1365, 16
        %v1435 = vrot.slane %v1433, 1
        %v1436 = vsel %vm460, %v1431, %v1435
        %v1438 = vshrl.u32 %v1318, 16
        %v1440 = vshll.u32 %v1318, 16
        %v1442 = vrot.slane %v1440, 1
        %v1443 = vor.u32 %v1438, %v1442
        %v1445 = vshll.u32 %v1366, 16
        %v1447 = vrot.slane %v1445, 1
        %v1448 = vsel %vm460, %v1443, %v1447
        %v1450 = vshrl.u32 %v1319, 16
        %v1452 = vshll.u32 %v1319, 16
        %v1454 = vrot.slane %v1452, 1
        %v1455 = vor.u32 %v1450, %v1454
        %v1457 = vshll.u32 %v1367, 16
        %v1459 = vrot.slane %v1457, 1
        %v1460 = vsel %vm460, %v1455, %v1459
        %v1462 = vshrl.u32 %v1320, 16
        %v1464 = vshll.u32 %v1320, 16
        %v1466 = vrot.slane %v1464, 1
        %v1467 = vor.u32 %v1462, %v1466
        %v1469 = vshll.u32 %v1368, 16
        %v1471 = vrot.slane %v1469, 1
        %v1472 = vsel %vm460, %v1467, %v1471
        %v1474 = vshrl.u32 %v1321, 16
        %v1476 = vshll.u32 %v1321, 16
        %v1478 = vrot.slane %v1476, 1
        %v1479 = vor.u32 %v1474, %v1478
        %v1481 = vshll.u32 %v1369, 16
        %v1483 = vrot.slane %v1481, 1
        %v1484 = vsel %vm460, %v1479, %v1483
        %v1486 = vshrl.u32 %v1322, 16
        %v1488 = vshll.u32 %v1322, 16
        %v1490 = vrot.slane %v1488, 1
        %v1491 = vor.u32 %v1486, %v1490
        %v1493 = vshll.u32 %v1370, 16
        %v1495 = vrot.slane %v1493, 1
        %v1496 = vsel %vm460, %v1491, %v1495
        %v1498 = vshrl.u32 %v1323, 16
        %v1500 = vshll.u32 %v1323, 16
        %v1502 = vrot.slane %v1500, 1
        %v1503 = vor.u32 %v1498, %v1502
        %v1505 = vshll.u32 %v1371, 16
        %v1507 = vrot.slane %v1505, 1
        %v1508 = vsel %vm460, %v1503, %v1507
        %v1510 = vshrl.u32 %v1324, 16
        %v1512 = vshll.u32 %v1324, 16
        %v1514 = vrot.slane %v1512, 1
        %v1515 = vor.u32 %v1510, %v1514
        %v1517 = vshll.u32 %v1372, 16
        %v1519 = vrot.slane %v1517, 1
        %v1520 = vsel %vm460, %v1515, %v1519
        %v1522 = vshrl.u32 %v1325, 16
        %v1524 = vshll.u32 %v1325, 16
        %v1526 = vrot.slane %v1524, 1
        %v1527 = vor.u32 %v1522, %v1526
        %v1529 = vshll.u32 %v1373, 16
        %v1531 = vrot.slane %v1529, 1
        %v1532 = vsel %vm460, %v1527, %v1531
        %v1534 = vshrl.u32 %v1326, 16
        %v1536 = vshll.u32 %v1326, 16
        %v1538 = vrot.slane %v1536, 1
        %v1539 = vor.u32 %v1534, %v1538
        %v1541 = vshll.u32 %v1374, 16
        %v1543 = vrot.slane %v1541, 1
        %v1544 = vsel %vm460, %v1539, %v1543
        %v1546 = vshrl.u32 %v1327, 16
        %v1548 = vshll.u32 %v1327, 16
        %v1550 = vrot.slane %v1548, 1
        %v1551 = vor.u32 %v1546, %v1550
        %v1553 = vshll.u32 %v1375, 16
        %v1555 = vrot.slane %v1553, 1
        %v1556 = vsel %vm460, %v1551, %v1555
        %v1558 = vshrl.u32 %v1328, 16
        %v1560 = vshll.u32 %v1328, 16
        %v1562 = vrot.slane %v1560, 1
        %v1563 = vor.u32 %v1558, %v1562
        %v1565 = vshll.u32 %v1376, 16
        %v1567 = vrot.slane %v1565, 1
        %v1568 = vsel %vm460, %v1563, %v1567
        %1569 = vrot.lane.b32.xlu0 %v1388, 4
        %v1570 = vpop.permute.xlu0 %1569
        %1571 = vrot.lane.b32.xlu0 %v1400, 4
        %v1572 = vpop.permute.xlu0 %1571
        %1573 = vrot.lane.b32.xlu0 %v1412, 4
        %v1574 = vpop.permute.xlu0 %1573
        %1575 = vrot.lane.b32.xlu0 %v1424, 4
        %v1576 = vpop.permute.xlu0 %1575
        %1577 = vrot.lane.b32.xlu0 %v1436, 4
        %v1578 = vpop.permute.xlu0 %1577
        %1579 = vrot.lane.b32.xlu0 %v1448, 4
        %v1580 = vpop.permute.xlu0 %1579
        %1581 = vrot.lane.b32.xlu0 %v1460, 4
        %v1582 = vpop.permute.xlu0 %1581
        %1583 = vrot.lane.b32.xlu0 %v1472, 4
        %v1584 = vpop.permute.xlu0 %1583
        %1585 = vrot.lane.b32.xlu0 %v1484, 4
        %v1586 = vpop.permute.xlu0 %1585
        %1587 = vrot.lane.b32.xlu0 %v1496, 4
        %v1588 = vpop.permute.xlu0 %1587
        %1589 = vrot.lane.b32.xlu0 %v1508, 4
        %v1590 = vpop.permute.xlu0 %1589
        %1591 = vrot.lane.b32.xlu0 %v1520, 4
        %v1592 = vpop.permute.xlu0 %1591
        %1593 = vrot.lane.b32.xlu0 %v1532, 4
        %v1594 = vpop.permute.xlu0 %1593
        %1595 = vrot.lane.b32.xlu0 %v1544, 4
        %v1596 = vpop.permute.xlu0 %1595
        %1597 = vrot.lane.b32.xlu0 %v1556, 4
        %v1598 = vpop.permute.xlu0 %1597
        %1599 = vrot.lane.b32.xlu0 %v1568, 4
        %v1600 = vpop.permute.xlu0 %1599
        %v1617 = vunpack.c.l.b16 %v1233
        %v1618 = vunpack.c.l.b16 %v1234
        %v1619 = vunpack.c.l.b16 %v1235
        %v1620 = vunpack.c.l.b16 %v1236
        %v1621 = vunpack.c.l.b16 %v1237
        %v1622 = vunpack.c.l.b16 %v1238
        %v1623 = vunpack.c.l.b16 %v1239
        %v1624 = vunpack.c.l.b16 %v1240
        %v1625 = vunpack.c.l.b16 %v1241
        %v1626 = vunpack.c.l.b16 %v1242
        %v1627 = vunpack.c.l.b16 %v1243
        %v1628 = vunpack.c.l.b16 %v1244
        %v1629 = vunpack.c.l.b16 %v1245
        %v1630 = vunpack.c.l.b16 %v1246
        %v1631 = vunpack.c.l.b16 %v1247
        %v1632 = vunpack.c.l.b16 %v1248
        %v1633 = vpack.c.b16 %v1282, %v1617
        %v1634 = vpack.c.b16 %v1284, %v1618
        %v1635 = vpack.c.b16 %v1286, %v1619
        %v1636 = vpack.c.b16 %v1288, %v1620
        %v1637 = vpack.c.b16 %v1290, %v1621
        %v1638 = vpack.c.b16 %v1292, %v1622
        %v1639 = vpack.c.b16 %v1294, %v1623
        %v1640 = vpack.c.b16 %v1296, %v1624
        %v1641 = vpack.c.b16 %v1298, %v1625
        %v1642 = vpack.c.b16 %v1300, %v1626
        %v1643 = vpack.c.b16 %v1302, %v1627
        %v1644 = vpack.c.b16 %v1304, %v1628
        %v1645 = vpack.c.b16 %v1306, %v1629
        %v1646 = vpack.c.b16 %v1308, %v1630
        %v1647 = vpack.c.b16 %v1310, %v1631
        %v1648 = vpack.c.b16 %v1312, %v1632
        %v1649 = vrot.slane %v1633, 1
        %v1650 = vrot.slane %v1361, 1
        %v1651 = vsel %vm733, %v1649, %v1650
        %v1652 = vrot.slane %v1634, 1
        %v1653 = vrot.slane %v1362, 1
        %v1654 = vsel %vm733, %v1652, %v1653
        %v1655 = vrot.slane %v1635, 1
        %v1656 = vrot.slane %v1363, 1
        %v1657 = vsel %vm733, %v1655, %v1656
        %v1658 = vrot.slane %v1636, 1
        %v1659 = vrot.slane %v1364, 1
        %v1660 = vsel %vm733, %v1658, %v1659
        %v1661 = vrot.slane %v1637, 1
        %v1662 = vrot.slane %v1365, 1
        %v1663 = vsel %vm733, %v1661, %v1662
        %v1664 = vrot.slane %v1638, 1
        %v1665 = vrot.slane %v1366, 1
        %v1666 = vsel %vm733, %v1664, %v1665
        %v1667 = vrot.slane %v1639, 1
        %v1668 = vrot.slane %v1367, 1
        %v1669 = vsel %vm733, %v1667, %v1668
        %v1670 = vrot.slane %v1640, 1
        %v1671 = vrot.slane %v1368, 1
        %v1672 = vsel %vm733, %v1670, %v1671
        %v1673 = vrot.slane %v1641, 1
        %v1674 = vrot.slane %v1369, 1
        %v1675 = vsel %vm733, %v1673, %v1674
        %v1676 = vrot.slane %v1642, 1
        %v1677 = vrot.slane %v1370, 1
        %v1678 = vsel %vm733, %v1676, %v1677
        %v1679 = vrot.slane %v1643, 1
        %v1680 = vrot.slane %v1371, 1
        %v1681 = vsel %vm733, %v1679, %v1680
        %v1682 = vrot.slane %v1644, 1
        %v1683 = vrot.slane %v1372, 1
        %v1684 = vsel %vm733, %v1682, %v1683
        %v1685 = vrot.slane %v1645, 1
        %v1686 = vrot.slane %v1373, 1
        %v1687 = vsel %vm733, %v1685, %v1686
        %v1688 = vrot.slane %v1646, 1
        %v1689 = vrot.slane %v1374, 1
        %v1690 = vsel %vm733, %v1688, %v1689
        %v1691 = vrot.slane %v1647, 1
        %v1692 = vrot.slane %v1375, 1
        %v1693 = vsel %vm733, %v1691, %v1692
        %v1694 = vrot.slane %v1648, 1
        %v1695 = vrot.slane %v1376, 1
        %v1696 = vsel %vm733, %v1694, %v1695
        %1697 = vrot.lane.b32.xlu0 %v1651, 8
        %v1698 = vpop.permute.xlu0 %1697
        %1699 = vrot.lane.b32.xlu0 %v1654, 8
        %v1700 = vpop.permute.xlu0 %1699
        %1701 = vrot.lane.b32.xlu0 %v1657, 8
        %v1702 = vpop.permute.xlu0 %1701
        %1703 = vrot.lane.b32.xlu0 %v1660, 8
        %v1704 = vpop.permute.xlu0 %1703
        %1705 = vrot.lane.b32.xlu0 %v1663, 8
        %v1706 = vpop.permute.xlu0 %1705
        %1707 = vrot.lane.b32.xlu0 %v1666, 8
        %v1708 = vpop.permute.xlu0 %1707
        %1709 = vrot.lane.b32.xlu0 %v1669, 8
        %v1710 = vpop.permute.xlu0 %1709
        %1711 = vrot.lane.b32.xlu0 %v1672, 8
        %v1712 = vpop.permute.xlu0 %1711
        %1713 = vrot.lane.b32.xlu0 %v1675, 8
        %v1714 = vpop.permute.xlu0 %1713
        %1715 = vrot.lane.b32.xlu0 %v1678, 8
        %v1716 = vpop.permute.xlu0 %1715
        %1717 = vrot.lane.b32.xlu0 %v1681, 8
        %v1718 = vpop.permute.xlu0 %1717
        %1719 = vrot.lane.b32.xlu0 %v1684, 8
        %v1720 = vpop.permute.xlu0 %1719
        %1721 = vrot.lane.b32.xlu0 %v1687, 8
        %v1722 = vpop.permute.xlu0 %1721
        %1723 = vrot.lane.b32.xlu0 %v1690, 8
        %v1724 = vpop.permute.xlu0 %1723
        %1725 = vrot.lane.b32.xlu0 %v1693, 8
        %v1726 = vpop.permute.xlu0 %1725
        %1727 = vrot.lane.b32.xlu0 %v1696, 8
        %v1728 = vpop.permute.xlu0 %1727
        %v1730 = vsel %vm814, %v1313, %v1570
        %v1732 = vsel %vm814, %v1314, %v1572
        %v1734 = vsel %vm814, %v1315, %v1574
        %v1736 = vsel %vm814, %v1316, %v1576
        %v1738 = vsel %vm814, %v1317, %v1578
        %v1740 = vsel %vm814, %v1318, %v1580
        %v1742 = vsel %vm814, %v1319, %v1582
        %v1744 = vsel %vm814, %v1320, %v1584
        %v1746 = vsel %vm814, %v1321, %v1586
        %v1748 = vsel %vm814, %v1322, %v1588
        %v1750 = vsel %vm814, %v1323, %v1590
        %v1752 = vsel %vm814, %v1324, %v1592
        %v1754 = vsel %vm814, %v1325, %v1594
        %v1756 = vsel %vm814, %v1326, %v1596
        %v1758 = vsel %vm814, %v1327, %v1598
        %v1760 = vsel %vm814, %v1328, %v1600
        %v1762 = vsel %vm847, %v1730, %v1698
        %v1764 = vsel %vm847, %v1732, %v1700
        %v1766 = vsel %vm847, %v1734, %v1702
        %v1768 = vsel %vm847, %v1736, %v1704
        %v1770 = vsel %vm847, %v1738, %v1706
        %v1772 = vsel %vm847, %v1740, %v1708
        %v1774 = vsel %vm847, %v1742, %v1710
        %v1776 = vsel %vm847, %v1744, %v1712
        %v1778 = vsel %vm847, %v1746, %v1714
        %v1780 = vsel %vm847, %v1748, %v1716
        %v1782 = vsel %vm847, %v1750, %v1718
        %v1784 = vsel %vm847, %v1752, %v1720
        %v1786 = vsel %vm847, %v1754, %v1722
        %v1788 = vsel %vm847, %v1756, %v1724
        %v1790 = vsel %vm847, %v1758, %v1726
        %v1792 = vsel %vm847, %v1760, %v1728
        %v1793 = vld [vmem:[#allocation2] sm:$0xff]
        %v1794 = vld [vmem:[#allocation2 + $0x8] sm:$0xff]
        %v1795 = vld [vmem:[#allocation2 + $0x10] sm:$0xff]
        %v1796 = vld [vmem:[#allocation2 + $0x18] sm:$0xff]
        %v1797 = vld [vmem:[#allocation2 + $0x20] sm:$0xff]
        %v1798 = vld [vmem:[#allocation2 + $0x28] sm:$0xff]
        %v1799 = vld [vmem:[#allocation2 + $0x30] sm:$0xff]
        %v1800 = vld [vmem:[#allocation2 + $0x38] sm:$0xff]
        %v1801 = vld [vmem:[#allocation2 + $0x40] sm:$0xff]
        %v1802 = vld [vmem:[#allocation2 + $0x48] sm:$0xff]
        %v1803 = vld [vmem:[#allocation2 + $0x50] sm:$0xff]
        %v1804 = vld [vmem:[#allocation2 + $0x58] sm:$0xff]
        %v1805 = vld [vmem:[#allocation2 + $0x60] sm:$0xff]
        %v1806 = vld [vmem:[#allocation2 + $0x68] sm:$0xff]
        %v1807 = vld [vmem:[#allocation2 + $0x70] sm:$0xff]
        %v1808 = vld [vmem:[#allocation2 + $0x78] sm:$0xff]
        %v1809 = vld [vmem:[#allocation2 + $0x80] sm:$0xff]
        %v1810 = vld [vmem:[#allocation2 + $0x88] sm:$0xff]
        %v1811 = vld [vmem:[#allocation2 + $0x90] sm:$0xff]
        %v1812 = vld [vmem:[#allocation2 + $0x98] sm:$0xff]
        %v1813 = vld [vmem:[#allocation2 + $0xa0] sm:$0xff]
        %v1814 = vld [vmem:[#allocation2 + $0xa8] sm:$0xff]
        %v1815 = vld [vmem:[#allocation2 + $0xb0] sm:$0xff]
        %v1816 = vld [vmem:[#allocation2 + $0xb8] sm:$0xff]
        %v1817 = vld [vmem:[#allocation2 + $0xc0] sm:$0xff]
        %v1818 = vld [vmem:[#allocation2 + $0xc8] sm:$0xff]
        %v1819 = vld [vmem:[#allocation2 + $0xd0] sm:$0xff]
        %v1820 = vld [vmem:[#allocation2 + $0xd8] sm:$0xff]
        %v1821 = vld [vmem:[#allocation2 + $0xe0] sm:$0xff]
        %v1822 = vld [vmem:[#allocation2 + $0xe8] sm:$0xff]
        %v1823 = vld [vmem:[#allocation2 + $0xf0] sm:$0xff]
        %v1824 = vld [vmem:[#allocation2 + $0xf8] sm:$0xff]
        %s1825 = scalar_lea.vmem %s219, 8
        %v1826 = vld [vmem:[%s1825] sm:$0xf]
        %v1827 = vld [vmem:[%s1825 + $0x4] sm:$0x3]
        %v1830 = vunpack.c.l.b16 %v1826
        %v1831 = vunpack.c.l.b16 %v1827
        %v1832 = vpack.c.b16 %v1831, %v1830
        %v1833 = vsel %vm919, %v1762, 0
        %v1835 = vsel %vm919, %v1764, 0
        %v1837 = vsel %vm919, %v1766, 0
        %v1839 = vsel %vm919, %v1768, 0
        %v1841 = vsel %vm919, %v1770, 0
        %v1843 = vsel %vm919, %v1772, 0
        %v1845 = vsel %vm919, %v1774, 0
        %v1847 = vsel %vm919, %v1776, 0
        %v1849 = vsel %vm919, %v1778, 0
        %v1851 = vsel %vm919, %v1780, 0
        %v1853 = vsel %vm919, %v1782, 0
        %v1855 = vsel %vm919, %v1784, 0
        %v1857 = vsel %vm919, %v1786, 0
        %v1859 = vsel %vm919, %v1788, 0
        %v1861 = vsel %vm919, %v1790, 0
        %v1863 = vsel %vm919, %v1792, 0
        %v1866 = vsel %vm952, %v1832, 0
        %1868 = vmatprep.subr.bf16.mxu0 0
        %1869 = vmatpush1.bf16.msra.mxu0 %v1866
        %1870 = vmatprep.subr.bf16.mxu0 0
        %1871 = vmatpush1.bf16.msra.mxu0 0
        %1872 = vmatprep.subr.bf16.mxu0 0
        %1873 = vmatpush1.bf16.msra.mxu0 0
        %1874 = vmatprep.subr.bf16.mxu0 0
        %1875 = vmatpush1.bf16.msra.mxu0 0
        %1876 = vmatprep.subr.bf16.mxu0 0
        %1877 = vmatpush1.bf16.msra.mxu0 0
        %1878 = vmatprep.subr.bf16.mxu0 0
        %1879 = vmatpush1.bf16.msra.mxu0 0
        %1880 = vmatprep.subr.bf16.mxu0 0
        %1881 = vmatpush1.bf16.msra.mxu0 0
        %1882 = vmatprep.subr.bf16.mxu0 0
        %1883 = vmatpush1.bf16.msra.mxu0 0
        %1884 = vmatprep.subr.bf16.mxu0 0
        %1885 = vmatpush1.bf16.msra.mxu0 0
        %1886 = vmatprep.subr.bf16.mxu0 0
        %1887 = vmatpush1.bf16.msra.mxu0 0
        %1888 = vmatprep.subr.bf16.mxu0 0
        %1889 = vmatpush1.bf16.msra.mxu0 0
        %1890 = vmatprep.subr.bf16.mxu0 0
        %1891 = vmatpush1.bf16.msra.mxu0 0
        %1892 = vmatprep.subr.bf16.mxu0 0
        %1893 = vmatpush1.bf16.msra.mxu0 0
        %1894 = vmatprep.subr.bf16.mxu0 0
        %1895 = vmatpush1.bf16.msra.mxu0 0
        %1896 = vmatprep.subr.bf16.mxu0 0
        %1897 = vmatpush1.bf16.msra.mxu0 0
        %1898 = vmatprep.subr.bf16.mxu0 0
        %1899 = vmatpush1.bf16.msra.mxu0 0
        %1900 = vmatprep.mubr.bf16.mxu0 0
        %1901 = vmatmul.mubr.bf16.gmra.mrb[0].mxu0 %v1833
        %v1902 = vpop.f32.mrb[0].mxu0
        %v1903 = vadd.f32 0.0, %v1902
        %v1904 = vpop.f32.mrb[0].mxu0
        %v1905 = vpop.f32.mrb[0].mxu0
        %v1906 = vadd.f32 0.0, %v1905
        %v1907 = vpop.f32.mrb[0].mxu0
        %1908 = vmatprep.mubr.bf16.mxu0 0
        %1909 = vmatmul.mubr.bf16.gmra.mrb[0].mxu0 %v1835
        %v1910 = vpop.f32.mrb[0].mxu0
        %v1911 = vadd.f32 0.0, %v1910
        %v1912 = vpop.f32.mrb[0].mxu0
        %v1913 = vpop.f32.mrb[0].mxu0
        %v1914 = vadd.f32 0.0, %v1913
        %v1915 = vpop.f32.mrb[0].mxu0
        %1916 = vmatprep.mubr.bf16.mxu0 0
        %1917 = vmatmul.mubr.bf16.gmra.mrb[0].mxu0 %v1837
        %v1918 = vpop.f32.mrb[0].mxu0
        %v1919 = vadd.f32 0.0, %v1918
        %v1920 = vpop.f32.mrb[0].mxu0
        %v1921 = vpop.f32.mrb[0].mxu0
        %v1922 = vadd.f32 0.0, %v1921
        %v1923 = vpop.f32.mrb[0].mxu0
        %1924 = vmatprep.mubr.bf16.mxu0 0
        %1925 = vmatmul.mubr.bf16.gmra.mrb[0].mxu0 %v1839
        %v1926 = vpop.f32.mrb[0].mxu0
        %v1927 = vadd.f32 0.0, %v1926
        %v1928 = vpop.f32.mrb[0].mxu0
        %v1929 = vpop.f32.mrb[0].mxu0
        %v1930 = vadd.f32 0.0, %v1929
        %v1931 = vpop.f32.mrb[0].mxu0
        %1932 = vmatprep.mubr.bf16.mxu0 0
        %1933 = vmatmul.mubr.bf16.gmra.mrb[0].mxu0 %v1841
        %v1934 = vpop.f32.mrb[0].mxu0
        %v1935 = vadd.f32 0.0, %v1934
        %v1936 = vpop.f32.mrb[0].mxu0
        %v1937 = vpop.f32.mrb[0].mxu0
        %v1938 = vadd.f32 0.0, %v1937
        %v1939 = vpop.f32.mrb[0].mxu0
        %1940 = vmatprep.mubr.bf16.mxu0 0
        %1941 = vmatmul.mubr.bf16.gmra.mrb[0].mxu0 %v1843
        %v1942 = vpop.f32.mrb[0].mxu0
        %v1943 = vadd.f32 0.0, %v1942
        %v1944 = vpop.f32.mrb[0].mxu0
        %v1945 = vpop.f32.mrb[0].mxu0
        %v1946 = vadd.f32 0.0, %v1945
        %v1947 = vpop.f32.mrb[0].mxu0
        %1948 = vmatprep.mubr.bf16.mxu0 0
        %1949 = vmatmul.mubr.bf16.gmra.mrb[0].mxu0 %v1845
        %v1950 = vpop.f32.mrb[0].mxu0
        %v1951 = vadd.f32 0.0, %v1950
        %v1952 = vpop.f32.mrb[0].mxu0
        %v1953 = vpop.f32.mrb[0].mxu0
        %v1954 = vadd.f32 0.0, %v1953
        %v1955 = vpop.f32.mrb[0].mxu0
        %1956 = vmatprep.mubr.bf16.mxu0 0
        %1957 = vmatmul.mubr.bf16.gmra.mrb[0].mxu0 %v1847
        %v1958 = vpop.f32.mrb[0].mxu0
        %v1959 = vadd.f32 0.0, %v1958
        %v1960 = vpop.f32.mrb[0].mxu0
        %v1961 = vpop.f32.mrb[0].mxu0
        %v1962 = vadd.f32 0.0, %v1961
        %v1963 = vpop.f32.mrb[0].mxu0
        %1964 = vmatprep.mubr.bf16.mxu0 0
        %1965 = vmatmul.mubr.bf16.gmra.mrb[0].mxu0 %v1849
        %v1966 = vpop.f32.mrb[0].mxu0
        %v1967 = vadd.f32 0.0, %v1966
        %v1968 = vpop.f32.mrb[0].mxu0
        %v1969 = vpop.f32.mrb[0].mxu0
        %v1970 = vadd.f32 0.0, %v1969
        %v1971 = vpop.f32.mrb[0].mxu0
        %1972 = vmatprep.mubr.bf16.mxu0 0
        %1973 = vmatmul.mubr.bf16.gmra.mrb[0].mxu0 %v1851
        %v1974 = vpop.f32.mrb[0].mxu0
        %v1975 = vadd.f32 0.0, %v1974
        %v1976 = vpop.f32.mrb[0].mxu0
        %v1977 = vpop.f32.mrb[0].mxu0
        %v1978 = vadd.f32 0.0, %v1977
        %v1979 = vpop.f32.mrb[0].mxu0
        %1980 = vmatprep.mubr.bf16.mxu0 0
        %1981 = vmatmul.mubr.bf16.gmra.mrb[0].mxu0 %v1853
        %v1982 = vpop.f32.mrb[0].mxu0
        %v1983 = vadd.f32 0.0, %v1982
        %v1984 = vpop.f32.mrb[0].mxu0
        %v1985 = vpop.f32.mrb[0].mxu0
        %v1986 = vadd.f32 0.0, %v1985
        %v1987 = vpop.f32.mrb[0].mxu0
        %1988 = vmatprep.mubr.bf16.mxu0 0
        %1989 = vmatmul.mubr.bf16.gmra.mrb[0].mxu0 %v1855
        %v1990 = vpop.f32.mrb[0].mxu0
        %v1991 = vadd.f32 0.0, %v1990
        %v1992 = vpop.f32.mrb[0].mxu0
        %v1993 = vpop.f32.mrb[0].mxu0
        %v1994 = vadd.f32 0.0, %v1993
        %v1995 = vpop.f32.mrb[0].mxu0
        %1996 = vmatprep.mubr.bf16.mxu0 0
        %1997 = vmatmul.mubr.bf16.gmra.mrb[0].mxu0 %v1857
        %v1998 = vpop.f32.mrb[0].mxu0
        %v1999 = vadd.f32 0.0, %v1998
        %v2000 = vpop.f32.mrb[0].mxu0
        %v2001 = vpop.f32.mrb[0].mxu0
        %v2002 = vadd.f32 0.0, %v2001
        %v2003 = vpop.f32.mrb[0].mxu0
        %2004 = vmatprep.mubr.bf16.mxu0 0
        %2005 = vmatmul.mubr.bf16.gmra.mrb[0].mxu0 %v1859
        %v2006 = vpop.f32.mrb[0].mxu0
        %v2007 = vadd.f32 0.0, %v2006
        %v2008 = vpop.f32.mrb[0].mxu0
        %v2009 = vpop.f32.mrb[0].mxu0
        %v2010 = vadd.f32 0.0, %v2009
        %v2011 = vpop.f32.mrb[0].mxu0
        %2012 = vmatprep.mubr.bf16.mxu0 0
        %2013 = vmatmul.mubr.bf16.gmra.mrb[0].mxu0 %v1861
        %v2014 = vpop.f32.mrb[0].mxu0
        %v2015 = vadd.f32 0.0, %v2014
        %v2016 = vpop.f32.mrb[0].mxu0
        %v2017 = vpop.f32.mrb[0].mxu0
        %v2018 = vadd.f32 0.0, %v2017
        %v2019 = vpop.f32.mrb[0].mxu0
        %2020 = vmatprep.mubr.bf16.mxu0 0
        %2021 = vmatmul.mubr.bf16.gmra.mrb[0].mxu0 %v1863
        %v2022 = vpop.f32.mrb[0].mxu0
        %v2023 = vadd.f32 0.0, %v2022
        %v2024 = vpop.f32.mrb[0].mxu0
        %v2025 = vpop.f32.mrb[0].mxu0
        %v2026 = vadd.f32 0.0, %v2025
        %v2027 = vpop.f32.mrb[0].mxu0
        %2028 = vdwg.mxu0
        %v2029 = vadd.f32 %v1793, %v1903
        %v2030 = vadd.f32 %v1794, %v1906
        %v2031 = vadd.f32 %v1795, %v1911
        %v2032 = vadd.f32 %v1796, %v1914
        %v2033 = vadd.f32 %v1797, %v1919
        %v2034 = vadd.f32 %v1798, %v1922
        %v2035 = vadd.f32 %v1799, %v1927
        %v2036 = vadd.f32 %v1800, %v1930
        %v2037 = vadd.f32 %v1801, %v1935
        %v2038 = vadd.f32 %v1802, %v1938
        %v2039 = vadd.f32 %v1803, %v1943
        %v2040 = vadd.f32 %v1804, %v1946
        %v2041 = vadd.f32 %v1805, %v1951
        %v2042 = vadd.f32 %v1806, %v1954
        %v2043 = vadd.f32 %v1807, %v1959
        %v2044 = vadd.f32 %v1808, %v1962
        %v2045 = vadd.f32 %v1809, %v1967
        %v2046 = vadd.f32 %v1810, %v1970
        %v2047 = vadd.f32 %v1811, %v1975
        %v2048 = vadd.f32 %v1812, %v1978
        %v2049 = vadd.f32 %v1813, %v1983
        %v2050 = vadd.f32 %v1814, %v1986
        %v2051 = vadd.f32 %v1815, %v1991
        %v2052 = vadd.f32 %v1816, %v1994
        %v2053 = vadd.f32 %v1817, %v1999
        %v2054 = vadd.f32 %v1818, %v2002
        %v2055 = vadd.f32 %v1819, %v2007
        %v2056 = vadd.f32 %v1820, %v2010
        %v2057 = vadd.f32 %v1821, %v2015
        %v2058 = vadd.f32 %v1822, %v2018
        %v2059 = vadd.f32 %v1823, %v2023
        %v2060 = vadd.f32 %v1824, %v2026
        %2061 = vst [vmem:[#allocation2] sm:$0xff] %v2029
        %2062 = vst [vmem:[#allocation2 + $0x8] sm:$0xff] %v2030
        %2063 = vst [vmem:[#allocation2 + $0x10] sm:$0xff] %v2031
        %2064 = vst [vmem:[#allocation2 + $0x18] sm:$0xff] %v2032
        %2065 = vst [vmem:[#allocation2 + $0x20] sm:$0xff] %v2033
        %2066 = vst [vmem:[#allocation2 + $0x28] sm:$0xff] %v2034
        %2067 = vst [vmem:[#allocation2 + $0x30] sm:$0xff] %v2035
        %2068 = vst [vmem:[#allocation2 + $0x38] sm:$0xff] %v2036
        %2069 = vst [vmem:[#allocation2 + $0x40] sm:$0xff] %v2037
        %2070 = vst [vmem:[#allocation2 + $0x48] sm:$0xff] %v2038
        %2071 = vst [vmem:[#allocation2 + $0x50] sm:$0xff] %v2039
        %2072 = vst [vmem:[#allocation2 + $0x58] sm:$0xff] %v2040
        %2073 = vst [vmem:[#allocation2 + $0x60] sm:$0xff] %v2041
        %2074 = vst [vmem:[#allocation2 + $0x68] sm:$0xff] %v2042
        %2075 = vst [vmem:[#allocation2 + $0x70] sm:$0xff] %v2043
        %2076 = vst [vmem:[#allocation2 + $0x78] sm:$0xff] %v2044
        %2077 = vst [vmem:[#allocation2 + $0x80] sm:$0xff] %v2045
        %2078 = vst [vmem:[#allocation2 + $0x88] sm:$0xff] %v2046
        %2079 = vst [vmem:[#allocation2 + $0x90] sm:$0xff] %v2047
        %2080 = vst [vmem:[#allocation2 + $0x98] sm:$0xff] %v2048
        %2081 = vst [vmem:[#allocation2 + $0xa0] sm:$0xff] %v2049
        %2082 = vst [vmem:[#allocation2 + $0xa8] sm:$0xff] %v2050
        %2083 = vst [vmem:[#allocation2 + $0xb0] sm:$0xff] %v2051
        %2084 = vst [vmem:[#allocation2 + $0xb8] sm:$0xff] %v2052
        %2085 = vst [vmem:[#allocation2 + $0xc0] sm:$0xff] %v2053
        %2086 = vst [vmem:[#allocation2 + $0xc8] sm:$0xff] %v2054
        %2087 = vst [vmem:[#allocation2 + $0xd0] sm:$0xff] %v2055
        %2088 = vst [vmem:[#allocation2 + $0xd8] sm:$0xff] %v2056
        %2089 = vst [vmem:[#allocation2 + $0xe0] sm:$0xff] %v2057
        %2090 = vst [vmem:[#allocation2 + $0xe8] sm:$0xff] %v2058
        %2091 = vst [vmem:[#allocation2 + $0xf0] sm:$0xff] %v2059
        %2092 = vst [vmem:[#allocation2 + $0xf8] sm:$0xff] %v2060
        %s2093 = sadd.s32 %s225, 2
        %s2094 = smul.u32 %s2093, 3
        %s2095 = smul.addr %s2094, 4
        %s2096 = scalar_lea.vmem %s215, %s2095
        %v2097 = vld [vmem:[%s2096] sm:$0xf]
        %v2098 = vld [vmem:[%s2096 + $0x4] sm:$0xf]
        %v2099 = vld [vmem:[%s2096 + $0xc] sm:$0xf]
        %v2100 = vld [vmem:[%s2096 + $0x10] sm:$0xf]
        %v2101 = vld [vmem:[%s2096 + $0x18] sm:$0xf]
        %v2102 = vld [vmem:[%s2096 + $0x1c] sm:$0xf]
        %v2103 = vld [vmem:[%s2096 + $0x24] sm:$0xf]
        %v2104 = vld [vmem:[%s2096 + $0x28] sm:$0xf]
        %v2105 = vld [vmem:[%s2096 + $0x30] sm:$0xf]
        %v2106 = vld [vmem:[%s2096 + $0x34] sm:$0xf]
        %v2107 = vld [vmem:[%s2096 + $0x3c] sm:$0xf]
        %v2108 = vld [vmem:[%s2096 + $0x40] sm:$0xf]
        %v2109 = vld [vmem:[%s2096 + $0x48] sm:$0xf]
        %v2110 = vld [vmem:[%s2096 + $0x4c] sm:$0xf]
        %v2111 = vld [vmem:[%s2096 + $0x54] sm:$0xf]
        %v2112 = vld [vmem:[%s2096 + $0x58] sm:$0xf]
        %v2113 = vld [vmem:[%s2096 + $0x60] sm:$0xf]
        %v2114 = vld [vmem:[%s2096 + $0x64] sm:$0xf]
        %v2115 = vld [vmem:[%s2096 + $0x6c] sm:$0xf]
        %v2116 = vld [vmem:[%s2096 + $0x70] sm:$0xf]
        %v2117 = vld [vmem:[%s2096 + $0x78] sm:$0xf]
        %v2118 = vld [vmem:[%s2096 + $0x7c] sm:$0xf]
        %v2119 = vld [vmem:[%s2096 + $0x84] sm:$0xf]
        %v2120 = vld [vmem:[%s2096 + $0x88] sm:$0xf]
        %v2121 = vld [vmem:[%s2096 + $0x90] sm:$0xf]
        %v2122 = vld [vmem:[%s2096 + $0x94] sm:$0xf]
        %v2123 = vld [vmem:[%s2096 + $0x9c] sm:$0xf]
        %v2124 = vld [vmem:[%s2096 + $0xa0] sm:$0xf]
        %v2125 = vld [vmem:[%s2096 + $0xa8] sm:$0xf]
        %v2126 = vld [vmem:[%s2096 + $0xac] sm:$0xf]
        %v2127 = vld [vmem:[%s2096 + $0xb4] sm:$0xf]
        %v2128 = vld [vmem:[%s2096 + $0xb8] sm:$0xf]
        %v2129 = vld [vmem:[%s2096 + $0x8] sm:$0x1]
        %v2130 = vld [vmem:[%s2096 + $0x14] sm:$0x1]
        %v2131 = vld [vmem:[%s2096 + $0x20] sm:$0x1]
        %v2132 = vld [vmem:[%s2096 + $0x2c] sm:$0x1]
        %v2133 = vld [vmem:[%s2096 + $0x38] sm:$0x1]
        %v2134 = vld [vmem:[%s2096 + $0x44] sm:$0x1]
        %v2135 = vld [vmem:[%s2096 + $0x50] sm:$0x1]
        %v2136 = vld [vmem:[%s2096 + $0x5c] sm:$0x1]
        %v2137 = vld [vmem:[%s2096 + $0x68] sm:$0x1]
        %v2138 = vld [vmem:[%s2096 + $0x74] sm:$0x1]
        %v2139 = vld [vmem:[%s2096 + $0x80] sm:$0x1]
        %v2140 = vld [vmem:[%s2096 + $0x8c] sm:$0x1]
        %v2141 = vld [vmem:[%s2096 + $0x98] sm:$0x1]
        %v2142 = vld [vmem:[%s2096 + $0xa4] sm:$0x1]
        %v2143 = vld [vmem:[%s2096 + $0xb0] sm:$0x1]
        %v2144 = vld [vmem:[%s2096 + $0xbc] sm:$0x1]
        %v2145 = vld [vmem:[%s2096] sm:$0xe]
        %v2146 = vld [vmem:[%s2096 + $0xc] sm:$0xe]
        %v2147 = vld [vmem:[%s2096 + $0x18] sm:$0xe]
        %v2148 = vld [vmem:[%s2096 + $0x24] sm:$0xe]
        %v2149 = vld [vmem:[%s2096 + $0x30] sm:$0xe]
        %v2150 = vld [vmem:[%s2096 + $0x3c] sm:$0xe]
        %v2151 = vld [vmem:[%s2096 + $0x48] sm:$0xe]
        %v2152 = vld [vmem:[%s2096 + $0x54] sm:$0xe]
        %v2153 = vld [vmem:[%s2096 + $0x60] sm:$0xe]
        %v2154 = vld [vmem:[%s2096 + $0x6c] sm:$0xe]
        %v2155 = vld [vmem:[%s2096 + $0x78] sm:$0xe]
        %v2156 = vld [vmem:[%s2096 + $0x84] sm:$0xe]
        %v2157 = vld [vmem:[%s2096 + $0x90] sm:$0xe]
        %v2158 = vld [vmem:[%s2096 + $0x9c] sm:$0xe]
        %v2159 = vld [vmem:[%s2096 + $0xa8] sm:$0xe]
        %v2160 = vld [vmem:[%s2096 + $0xb4] sm:$0xe]
        %v2193 = vunpack.c.l.b16 %v2097
        %v2194 = vunpack.c.l.b16 %v2098
        %v2195 = vunpack.c.l.b16 %v2099
        %v2196 = vunpack.c.l.b16 %v2100
        %v2197 = vunpack.c.l.b16 %v2101
        %v2198 = vunpack.c.l.b16 %v2102
        %v2199 = vunpack.c.l.b16 %v2103
        %v2200 = vunpack.c.l.b16 %v2104
        %v2201 = vunpack.c.l.b16 %v2105
        %v2202 = vunpack.c.l.b16 %v2106
        %v2203 = vunpack.c.l.b16 %v2107
        %v2204 = vunpack.c.l.b16 %v2108
        %v2205 = vunpack.c.l.b16 %v2109
        %v2206 = vunpack.c.l.b16 %v2110
        %v2207 = vunpack.c.l.b16 %v2111
        %v2208 = vunpack.c.l.b16 %v2112
        %v2209 = vunpack.c.l.b16 %v2113
        %v2210 = vunpack.c.l.b16 %v2114
        %v2211 = vunpack.c.l.b16 %v2115
        %v2212 = vunpack.c.l.b16 %v2116
        %v2213 = vunpack.c.l.b16 %v2117
        %v2214 = vunpack.c.l.b16 %v2118
        %v2215 = vunpack.c.l.b16 %v2119
        %v2216 = vunpack.c.l.b16 %v2120
        %v2217 = vunpack.c.l.b16 %v2121
        %v2218 = vunpack.c.l.b16 %v2122
        %v2219 = vunpack.c.l.b16 %v2123
        %v2220 = vunpack.c.l.b16 %v2124
        %v2221 = vunpack.c.l.b16 %v2125
        %v2222 = vunpack.c.l.b16 %v2126
        %v2223 = vunpack.c.l.b16 %v2127
        %v2224 = vunpack.c.l.b16 %v2128
        %v2225 = vpack.c.b16 %v2194, %v2193
        %v2226 = vpack.c.b16 %v2196, %v2195
        %v2227 = vpack.c.b16 %v2198, %v2197
        %v2228 = vpack.c.b16 %v2200, %v2199
        %v2229 = vpack.c.b16 %v2202, %v2201
        %v2230 = vpack.c.b16 %v2204, %v2203
        %v2231 = vpack.c.b16 %v2206, %v2205
        %v2232 = vpack.c.b16 %v2208, %v2207
        %v2233 = vpack.c.b16 %v2210, %v2209
        %v2234 = vpack.c.b16 %v2212, %v2211
        %v2235 = vpack.c.b16 %v2214, %v2213
        %v2236 = vpack.c.b16 %v2216, %v2215
        %v2237 = vpack.c.b16 %v2218, %v2217
        %v2238 = vpack.c.b16 %v2220, %v2219
        %v2239 = vpack.c.b16 %v2222, %v2221
        %v2240 = vpack.c.b16 %v2224, %v2223
        %v2257 = vunpack.c.l.b16 %v2129
        %v2258 = vunpack.c.l.b16 %v2130
        %v2259 = vunpack.c.l.b16 %v2131
        %v2260 = vunpack.c.l.b16 %v2132
        %v2261 = vunpack.c.l.b16 %v2133
        %v2262 = vunpack.c.l.b16 %v2134
        %v2263 = vunpack.c.l.b16 %v2135
        %v2264 = vunpack.c.l.b16 %v2136
        %v2265 = vunpack.c.l.b16 %v2137
        %v2266 = vunpack.c.l.b16 %v2138
        %v2267 = vunpack.c.l.b16 %v2139
        %v2268 = vunpack.c.l.b16 %v2140
        %v2269 = vunpack.c.l.b16 %v2141
        %v2270 = vunpack.c.l.b16 %v2142
        %v2271 = vunpack.c.l.b16 %v2143
        %v2272 = vunpack.c.l.b16 %v2144
        %v2273 = vpack.c.b16 %v2257, %v2257
        %v2274 = vpack.c.b16 %v2258, %v2258
        %v2275 = vpack.c.b16 %v2259, %v2259
        %v2276 = vpack.c.b16 %v2260, %v2260
        %v2277 = vpack.c.b16 %v2261, %v2261
        %v2278 = vpack.c.b16 %v2262, %v2262
        %v2279 = vpack.c.b16 %v2263, %v2263
        %v2280 = vpack.c.b16 %v2264, %v2264
        %v2281 = vpack.c.b16 %v2265, %v2265
        %v2282 = vpack.c.b16 %v2266, %v2266
        %v2283 = vpack.c.b16 %v2267, %v2267
        %v2284 = vpack.c.b16 %v2268, %v2268
        %v2285 = vpack.c.b16 %v2269, %v2269
        %v2286 = vpack.c.b16 %v2270, %v2270
        %v2287 = vpack.c.b16 %v2271, %v2271
        %v2288 = vpack.c.b16 %v2272, %v2272
        %v2290 = vshrl.u32 %v2225, 16
        %v2292 = vshll.u32 %v2225, 16
        %v2294 = vrot.slane %v2292, 1
        %v2295 = vor.u32 %v2290, %v2294
        %v2297 = vshll.u32 %v2273, 16
        %v2299 = vrot.slane %v2297, 1
        %v2300 = vsel %vm460, %v2295, %v2299
        %v2302 = vshrl.u32 %v2226, 16
        %v2304 = vshll.u32 %v2226, 16
        %v2306 = vrot.slane %v2304, 1
        %v2307 = vor.u32 %v2302, %v2306
        %v2309 = vshll.u32 %v2274, 16
        %v2311 = vrot.slane %v2309, 1
        %v2312 = vsel %vm460, %v2307, %v2311
        %v2314 = vshrl.u32 %v2227, 16
        %v2316 = vshll.u32 %v2227, 16
        %v2318 = vrot.slane %v2316, 1
        %v2319 = vor.u32 %v2314, %v2318
        %v2321 = vshll.u32 %v2275, 16
        %v2323 = vrot.slane %v2321, 1
        %v2324 = vsel %vm460, %v2319, %v2323
        %v2326 = vshrl.u32 %v2228, 16
        %v2328 = vshll.u32 %v2228, 16
        %v2330 = vrot.slane %v2328, 1
        %v2331 = vor.u32 %v2326, %v2330
        %v2333 = vshll.u32 %v2276, 16
        %v2335 = vrot.slane %v2333, 1
        %v2336 = vsel %vm460, %v2331, %v2335
        %v2338 = vshrl.u32 %v2229, 16
        %v2340 = vshll.u32 %v2229, 16
        %v2342 = vrot.slane %v2340, 1
        %v2343 = vor.u32 %v2338, %v2342
        %v2345 = vshll.u32 %v2277, 16
        %v2347 = vrot.slane %v2345, 1
        %v2348 = vsel %vm460, %v2343, %v2347
        %v2350 = vshrl.u32 %v2230, 16
        %v2352 = vshll.u32 %v2230, 16
        %v2354 = vrot.slane %v2352, 1
        %v2355 = vor.u32 %v2350, %v2354
        %v2357 = vshll.u32 %v2278, 16
        %v2359 = vrot.slane %v2357, 1
        %v2360 = vsel %vm460, %v2355, %v2359
        %v2362 = vshrl.u32 %v2231, 16
        %v2364 = vshll.u32 %v2231, 16
        %v2366 = vrot.slane %v2364, 1
        %v2367 = vor.u32 %v2362, %v2366
        %v2369 = vshll.u32 %v2279, 16
        %v2371 = vrot.slane %v2369, 1
        %v2372 = vsel %vm460, %v2367, %v2371
        %v2374 = vshrl.u32 %v2232, 16
        %v2376 = vshll.u32 %v2232, 16
        %v2378 = vrot.slane %v2376, 1
        %v2379 = vor.u32 %v2374, %v2378
        %v2381 = vshll.u32 %v2280, 16
        %v2383 = vrot.slane %v2381, 1
        %v2384 = vsel %vm460, %v2379, %v2383
        %v2386 = vshrl.u32 %v2233, 16
        %v2388 = vshll.u32 %v2233, 16
        %v2390 = vrot.slane %v2388, 1
        %v2391 = vor.u32 %v2386, %v2390
        %v2393 = vshll.u32 %v2281, 16
        %v2395 = vrot.slane %v2393, 1
        %v2396 = vsel %vm460, %v2391, %v2395
        %v2398 = vshrl.u32 %v2234, 16
        %v2400 = vshll.u32 %v2234, 16
        %v2402 = vrot.slane %v2400, 1
        %v2403 = vor.u32 %v2398, %v2402
        %v2405 = vshll.u32 %v2282, 16
        %v2407 = vrot.slane %v2405, 1
        %v2408 = vsel %vm460, %v2403, %v2407
        %v2410 = vshrl.u32 %v2235, 16
        %v2412 = vshll.u32 %v2235, 16
        %v2414 = vrot.slane %v2412, 1
        %v2415 = vor.u32 %v2410, %v2414
        %v2417 = vshll.u32 %v2283, 16
        %v2419 = vrot.slane %v2417, 1
        %v2420 = vsel %vm460, %v2415, %v2419
        %v2422 = vshrl.u32 %v2236, 16
        %v2424 = vshll.u32 %v2236, 16
        %v2426 = vrot.slane %v2424, 1
        %v2427 = vor.u32 %v2422, %v2426
        %v2429 = vshll.u32 %v2284, 16
        %v2431 = vrot.slane %v2429, 1
        %v2432 = vsel %vm460, %v2427, %v2431
        %v2434 = vshrl.u32 %v2237, 16
        %v2436 = vshll.u32 %v2237, 16
        %v2438 = vrot.slane %v2436, 1
        %v2439 = vor.u32 %v2434, %v2438
        %v2441 = vshll.u32 %v2285, 16
        %v2443 = vrot.slane %v2441, 1
        %v2444 = vsel %vm460, %v2439, %v2443
        %v2446 = vshrl.u32 %v2238, 16
        %v2448 = vshll.u32 %v2238, 16
        %v2450 = vrot.slane %v2448, 1
        %v2451 = vor.u32 %v2446, %v2450
        %v2453 = vshll.u32 %v2286, 16
        %v2455 = vrot.slane %v2453, 1
        %v2456 = vsel %vm460, %v2451, %v2455
        %v2458 = vshrl.u32 %v2239, 16
        %v2460 = vshll.u32 %v2239, 16
        %v2462 = vrot.slane %v2460, 1
        %v2463 = vor.u32 %v2458, %v2462
        %v2465 = vshll.u32 %v2287, 16
        %v2467 = vrot.slane %v2465, 1
        %v2468 = vsel %vm460, %v2463, %v2467
        %v2470 = vshrl.u32 %v2240, 16
        %v2472 = vshll.u32 %v2240, 16
        %v2474 = vrot.slane %v2472, 1
        %v2475 = vor.u32 %v2470, %v2474
        %v2477 = vshll.u32 %v2288, 16
        %v2479 = vrot.slane %v2477, 1
        %v2480 = vsel %vm460, %v2475, %v2479
        %2481 = vrot.lane.b32.xlu0 %v2300, 4
        %v2482 = vpop.permute.xlu0 %2481
        %2483 = vrot.lane.b32.xlu0 %v2312, 4
        %v2484 = vpop.permute.xlu0 %2483
        %2485 = vrot.lane.b32.xlu0 %v2324, 4
        %v2486 = vpop.permute.xlu0 %2485
        %2487 = vrot.lane.b32.xlu0 %v2336, 4
        %v2488 = vpop.permute.xlu0 %2487
        %2489 = vrot.lane.b32.xlu0 %v2348, 4
        %v2490 = vpop.permute.xlu0 %2489
        %2491 = vrot.lane.b32.xlu0 %v2360, 4
        %v2492 = vpop.permute.xlu0 %2491
        %2493 = vrot.lane.b32.xlu0 %v2372, 4
        %v2494 = vpop.permute.xlu0 %2493
        %2495 = vrot.lane.b32.xlu0 %v2384, 4
        %v2496 = vpop.permute.xlu0 %2495
        %2497 = vrot.lane.b32.xlu0 %v2396, 4
        %v2498 = vpop.permute.xlu0 %2497
        %2499 = vrot.lane.b32.xlu0 %v2408, 4
        %v2500 = vpop.permute.xlu0 %2499
        %2501 = vrot.lane.b32.xlu0 %v2420, 4
        %v2502 = vpop.permute.xlu0 %2501
        %2503 = vrot.lane.b32.xlu0 %v2432, 4
        %v2504 = vpop.permute.xlu0 %2503
        %2505 = vrot.lane.b32.xlu0 %v2444, 4
        %v2506 = vpop.permute.xlu0 %2505
        %2507 = vrot.lane.b32.xlu0 %v2456, 4
        %v2508 = vpop.permute.xlu0 %2507
        %2509 = vrot.lane.b32.xlu0 %v2468, 4
        %v2510 = vpop.permute.xlu0 %2509
        %2511 = vrot.lane.b32.xlu0 %v2480, 4
        %v2512 = vpop.permute.xlu0 %2511
        %v2529 = vunpack.c.l.b16 %v2145
        %v2530 = vunpack.c.l.b16 %v2146
        %v2531 = vunpack.c.l.b16 %v2147
        %v2532 = vunpack.c.l.b16 %v2148
        %v2533 = vunpack.c.l.b16 %v2149
        %v2534 = vunpack.c.l.b16 %v2150
        %v2535 = vunpack.c.l.b16 %v2151
        %v2536 = vunpack.c.l.b16 %v2152
        %v2537 = vunpack.c.l.b16 %v2153
        %v2538 = vunpack.c.l.b16 %v2154
        %v2539 = vunpack.c.l.b16 %v2155
        %v2540 = vunpack.c.l.b16 %v2156
        %v2541 = vunpack.c.l.b16 %v2157
        %v2542 = vunpack.c.l.b16 %v2158
        %v2543 = vunpack.c.l.b16 %v2159
        %v2544 = vunpack.c.l.b16 %v2160
        %v2545 = vpack.c.b16 %v2194, %v2529
        %v2546 = vpack.c.b16 %v2196, %v2530
        %v2547 = vpack.c.b16 %v2198, %v2531
        %v2548 = vpack.c.b16 %v2200, %v2532
        %v2549 = vpack.c.b16 %v2202, %v2533
        %v2550 = vpack.c.b16 %v2204, %v2534
        %v2551 = vpack.c.b16 %v2206, %v2535
        %v2552 = vpack.c.b16 %v2208, %v2536
        %v2553 = vpack.c.b16 %v2210, %v2537
        %v2554 = vpack.c.b16 %v2212, %v2538
        %v2555 = vpack.c.b16 %v2214, %v2539
        %v2556 = vpack.c.b16 %v2216, %v2540
        %v2557 = vpack.c.b16 %v2218, %v2541
        %v2558 = vpack.c.b16 %v2220, %v2542
        %v2559 = vpack.c.b16 %v2222, %v2543
        %v2560 = vpack.c.b16 %v2224, %v2544
        %v2561 = vrot.slane %v2545, 1
        %v2562 = vrot.slane %v2273, 1
        %v2563 = vsel %vm733, %v2561, %v2562
        %v2564 = vrot.slane %v2546, 1
        %v2565 = vrot.slane %v2274, 1
        %v2566 = vsel %vm733, %v2564, %v2565
        %v2567 = vrot.slane %v2547, 1
        %v2568 = vrot.slane %v2275, 1
        %v2569 = vsel %vm733, %v2567, %v2568
        %v2570 = vrot.slane %v2548, 1
        %v2571 = vrot.slane %v2276, 1
        %v2572 = vsel %vm733, %v2570, %v2571
        %v2573 = vrot.slane %v2549, 1
        %v2574 = vrot.slane %v2277, 1
        %v2575 = vsel %vm733, %v2573, %v2574
        %v2576 = vrot.slane %v2550, 1
        %v2577 = vrot.slane %v2278, 1
        %v2578 = vsel %vm733, %v2576, %v2577
        %v2579 = vrot.slane %v2551, 1
        %v2580 = vrot.slane %v2279, 1
        %v2581 = vsel %vm733, %v2579, %v2580
        %v2582 = vrot.slane %v2552, 1
        %v2583 = vrot.slane %v2280, 1
        %v2584 = vsel %vm733, %v2582, %v2583
        %v2585 = vrot.slane %v2553, 1
        %v2586 = vrot.slane %v2281, 1
        %v2587 = vsel %vm733, %v2585, %v2586
        %v2588 = vrot.slane %v2554, 1
        %v2589 = vrot.slane %v2282, 1
        %v2590 = vsel %vm733, %v2588, %v2589
        %v2591 = vrot.slane %v2555, 1
        %v2592 = vrot.slane %v2283, 1
        %v2593 = vsel %vm733, %v2591, %v2592
        %v2594 = vrot.slane %v2556, 1
        %v2595 = vrot.slane %v2284, 1
        %v2596 = vsel %vm733, %v2594, %v2595
        %v2597 = vrot.slane %v2557, 1
        %v2598 = vrot.slane %v2285, 1
        %v2599 = vsel %vm733, %v2597, %v2598
        %v2600 = vrot.slane %v2558, 1
        %v2601 = vrot.slane %v2286, 1
        %v2602 = vsel %vm733, %v2600, %v2601
        %v2603 = vrot.slane %v2559, 1
        %v2604 = vrot.slane %v2287, 1
        %v2605 = vsel %vm733, %v2603, %v2604
        %v2606 = vrot.slane %v2560, 1
        %v2607 = vrot.slane %v2288, 1
        %v2608 = vsel %vm733, %v2606, %v2607
        %2609 = vrot.lane.b32.xlu0 %v2563, 8
        %v2610 = vpop.permute.xlu0 %2609
        %2611 = vrot.lane.b32.xlu0 %v2566, 8
        %v2612 = vpop.permute.xlu0 %2611
        %2613 = vrot.lane.b32.xlu0 %v2569, 8
        %v2614 = vpop.permute.xlu0 %2613
        %2615 = vrot.lane.b32.xlu0 %v2572, 8
        %v2616 = vpop.permute.xlu0 %2615
        %2617 = vrot.lane.b32.xlu0 %v2575, 8
        %v2618 = vpop.permute.xlu0 %2617
        %2619 = vrot.lane.b32.xlu0 %v2578, 8
        %v2620 = vpop.permute.xlu0 %2619
        %2621 = vrot.lane.b32.xlu0 %v2581, 8
        %v2622 = vpop.permute.xlu0 %2621
        %2623 = vrot.lane.b32.xlu0 %v2584, 8
        %v2624 = vpop.permute.xlu0 %2623
        %2625 = vrot.lane.b32.xlu0 %v2587, 8
        %v2626 = vpop.permute.xlu0 %2625
        %2627 = vrot.lane.b32.xlu0 %v2590, 8
        %v2628 = vpop.permute.xlu0 %2627
        %2629 = vrot.lane.b32.xlu0 %v2593, 8
        %v2630 = vpop.permute.xlu0 %2629
        %2631 = vrot.lane.b32.xlu0 %v2596, 8
        %v2632 = vpop.permute.xlu0 %2631
        %2633 = vrot.lane.b32.xlu0 %v2599, 8
        %v2634 = vpop.permute.xlu0 %2633
        %2635 = vrot.lane.b32.xlu0 %v2602, 8
        %v2636 = vpop.permute.xlu0 %2635
        %2637 = vrot.lane.b32.xlu0 %v2605, 8
        %v2638 = vpop.permute.xlu0 %2637
        %2639 = vrot.lane.b32.xlu0 %v2608, 8
        %v2640 = vpop.permute.xlu0 %2639
        %v2642 = vsel %vm814, %v2225, %v2482
        %v2644 = vsel %vm814, %v2226, %v2484
        %v2646 = vsel %vm814, %v2227, %v2486
        %v2648 = vsel %vm814, %v2228, %v2488
        %v2650 = vsel %vm814, %v2229, %v2490
        %v2652 = vsel %vm814, %v2230, %v2492
        %v2654 = vsel %vm814, %v2231, %v2494
        %v2656 = vsel %vm814, %v2232, %v2496
        %v2658 = vsel %vm814, %v2233, %v2498
        %v2660 = vsel %vm814, %v2234, %v2500
        %v2662 = vsel %vm814, %v2235, %v2502
        %v2664 = vsel %vm814, %v2236, %v2504
        %v2666 = vsel %vm814, %v2237, %v2506
        %v2668 = vsel %vm814, %v2238, %v2508
        %v2670 = vsel %vm814, %v2239, %v2510
        %v2672 = vsel %vm814, %v2240, %v2512
        %v2674 = vsel %vm847, %v2642, %v2610
        %v2676 = vsel %vm847, %v2644, %v2612
        %v2678 = vsel %vm847, %v2646, %v2614
        %v2680 = vsel %vm847, %v2648, %v2616
        %v2682 = vsel %vm847, %v2650, %v2618
        %v2684 = vsel %vm847, %v2652, %v2620
        %v2686 = vsel %vm847, %v2654, %v2622
        %v2688 = vsel %vm847, %v2656, %v2624
        %v2690 = vsel %vm847, %v2658, %v2626
        %v2692 = vsel %vm847, %v2660, %v2628
        %v2694 = vsel %vm847, %v2662, %v2630
        %v2696 = vsel %vm847, %v2664, %v2632
        %v2698 = vsel %vm847, %v2666, %v2634
        %v2700 = vsel %vm847, %v2668, %v2636
        %v2702 = vsel %vm847, %v2670, %v2638
        %v2704 = vsel %vm847, %v2672, %v2640
        %v2705 = vld [vmem:[#allocation2] sm:$0xff]
        %v2706 = vld [vmem:[#allocation2 + $0x8] sm:$0xff]
        %v2707 = vld [vmem:[#allocation2 + $0x10] sm:$0xff]
        %v2708 = vld [vmem:[#allocation2 + $0x18] sm:$0xff]
        %v2709 = vld [vmem:[#allocation2 + $0x20] sm:$0xff]
        %v2710 = vld [vmem:[#allocation2 + $0x28] sm:$0xff]
        %v2711 = vld [vmem:[#allocation2 + $0x30] sm:$0xff]
        %v2712 = vld [vmem:[#allocation2 + $0x38] sm:$0xff]
        %v2713 = vld [vmem:[#allocation2 + $0x40] sm:$0xff]
        %v2714 = vld [vmem:[#allocation2 + $0x48] sm:$0xff]
        %v2715 = vld [vmem:[#allocation2 + $0x50] sm:$0xff]
        %v2716 = vld [vmem:[#allocation2 + $0x58] sm:$0xff]
        %v2717 = vld [vmem:[#allocation2 + $0x60] sm:$0xff]
        %v2718 = vld [vmem:[#allocation2 + $0x68] sm:$0xff]
        %v2719 = vld [vmem:[#allocation2 + $0x70] sm:$0xff]
        %v2720 = vld [vmem:[#allocation2 + $0x78] sm:$0xff]
        %v2721 = vld [vmem:[#allocation2 + $0x80] sm:$0xff]
        %v2722 = vld [vmem:[#allocation2 + $0x88] sm:$0xff]
        %v2723 = vld [vmem:[#allocation2 + $0x90] sm:$0xff]
        %v2724 = vld [vmem:[#allocation2 + $0x98] sm:$0xff]
        %v2725 = vld [vmem:[#allocation2 + $0xa0] sm:$0xff]
        %v2726 = vld [vmem:[#allocation2 + $0xa8] sm:$0xff]
        %v2727 = vld [vmem:[#allocation2 + $0xb0] sm:$0xff]
        %v2728 = vld [vmem:[#allocation2 + $0xb8] sm:$0xff]
        %v2729 = vld [vmem:[#allocation2 + $0xc0] sm:$0xff]
        %v2730 = vld [vmem:[#allocation2 + $0xc8] sm:$0xff]
        %v2731 = vld [vmem:[#allocation2 + $0xd0] sm:$0xff]
        %v2732 = vld [vmem:[#allocation2 + $0xd8] sm:$0xff]
        %v2733 = vld [vmem:[#allocation2 + $0xe0] sm:$0xff]
        %v2734 = vld [vmem:[#allocation2 + $0xe8] sm:$0xff]
        %v2735 = vld [vmem:[#allocation2 + $0xf0] sm:$0xff]
        %v2736 = vld [vmem:[#allocation2 + $0xf8] sm:$0xff]
        %s2737 = scalar_lea.vmem %s219, 16
        %v2738 = vld [vmem:[%s2737] sm:$0xf]
        %v2739 = vld [vmem:[%s2737 + $0x4] sm:$0x3]
        %v2742 = vunpack.c.l.b16 %v2738
        %v2743 = vunpack.c.l.b16 %v2739
        %v2744 = vpack.c.b16 %v2743, %v2742
        %v2745 = vsel %vm919, %v2674, 0
        %v2747 = vsel %vm919, %v2676, 0
        %v2749 = vsel %vm919, %v2678, 0
        %v2751 = vsel %vm919, %v2680, 0
        %v2753 = vsel %vm919, %v2682, 0
        %v2755 = vsel %vm919, %v2684, 0
        %v2757 = vsel %vm919, %v2686, 0
        %v2759 = vsel %vm919, %v2688, 0
        %v2761 = vsel %vm919, %v2690, 0
        %v2763 = vsel %vm919, %v2692, 0
        %v2765 = vsel %vm919, %v2694, 0
        %v2767 = vsel %vm919, %v2696, 0
        %v2769 = vsel %vm919, %v2698, 0
        %v2771 = vsel %vm919, %v2700, 0
        %v2773 = vsel %vm919, %v2702, 0
        %v2775 = vsel %vm919, %v2704, 0
        %v2778 = vsel %vm952, %v2744, 0
        %2780 = vmatprep.subr.bf16.mxu0 0
        %2781 = vmatpush1.bf16.msra.mxu0 %v2778
        %2782 = vmatprep.subr.bf16.mxu0 0
        %2783 = vmatpush1.bf16.msra.mxu0 0
        %2784 = vmatprep.subr.bf16.mxu0 0
        %2785 = vmatpush1.bf16.msra.mxu0 0
        %2786 = vmatprep.subr.bf16.mxu0 0
        %2787 = vmatpush1.bf16.msra.mxu0 0
        %2788 = vmatprep.subr.bf16.mxu0 0
        %2789 = vmatpush1.bf16.msra.mxu0 0
        %2790 = vmatprep.subr.bf16.mxu0 0
        %2791 = vmatpush1.bf16.msra.mxu0 0
        %2792 = vmatprep.subr.bf16.mxu0 0
        %2793 = vmatpush1.bf16.msra.mxu0 0
        %2794 = vmatprep.subr.bf16.mxu0 0
        %2795 = vmatpush1.bf16.msra.mxu0 0
        %2796 = vmatprep.subr.bf16.mxu0 0
        %2797 = vmatpush1.bf16.msra.mxu0 0
        %2798 = vmatprep.subr.bf16.mxu0 0
        %2799 = vmatpush1.bf16.msra.mxu0 0
        %2800 = vmatprep.subr.bf16.mxu0 0
        %2801 = vmatpush1.bf16.msra.mxu0 0
        %2802 = vmatprep.subr.bf16.mxu0 0
        %2803 = vmatpush1.bf16.msra.mxu0 0
        %2804 = vmatprep.subr.bf16.mxu0 0
        %2805 = vmatpush1.bf16.msra.mxu0 0
        %2806 = vmatprep.subr.bf16.mxu0 0
        %2807 = vmatpush1.bf16.msra.mxu0 0
        %2808 = vmatprep.subr.bf16.mxu0 0
        %2809 = vmatpush1.bf16.msra.mxu0 0
        %2810 = vmatprep.subr.bf16.mxu0 0
        %2811 = vmatpush1.bf16.msra.mxu0 0
        %2812 = vmatprep.mubr.bf16.mxu0 0
        %2813 = vmatmul.mubr.bf16.gmra.mrb[0].mxu0 %v2745
        %v2814 = vpop.f32.mrb[0].mxu0
        %v2815 = vadd.f32 0.0, %v2814
        %v2816 = vpop.f32.mrb[0].mxu0
        %v2817 = vpop.f32.mrb[0].mxu0
        %v2818 = vadd.f32 0.0, %v2817
        %v2819 = vpop.f32.mrb[0].mxu0
        %2820 = vmatprep.mubr.bf16.mxu0 0
        %2821 = vmatmul.mubr.bf16.gmra.mrb[0].mxu0 %v2747
        %v2822 = vpop.f32.mrb[0].mxu0
        %v2823 = vadd.f32 0.0, %v2822
        %v2824 = vpop.f32.mrb[0].mxu0
        %v2825 = vpop.f32.mrb[0].mxu0
        %v2826 = vadd.f32 0.0, %v2825
        %v2827 = vpop.f32.mrb[0].mxu0
        %2828 = vmatprep.mubr.bf16.mxu0 0
        %2829 = vmatmul.mubr.bf16.gmra.mrb[0].mxu0 %v2749
        %v2830 = vpop.f32.mrb[0].mxu0
        %v2831 = vadd.f32 0.0, %v2830
        %v2832 = vpop.f32.mrb[0].mxu0
        %v2833 = vpop.f32.mrb[0].mxu0
        %v2834 = vadd.f32 0.0, %v2833
        %v2835 = vpop.f32.mrb[0].mxu0
        %2836 = vmatprep.mubr.bf16.mxu0 0
        %2837 = vmatmul.mubr.bf16.gmra.mrb[0].mxu0 %v2751
        %v2838 = vpop.f32.mrb[0].mxu0
        %v2839 = vadd.f32 0.0, %v2838
        %v2840 = vpop.f32.mrb[0].mxu0
        %v2841 = vpop.f32.mrb[0].mxu0
        %v2842 = vadd.f32 0.0, %v2841
        %v2843 = vpop.f32.mrb[0].mxu0
        %2844 = vmatprep.mubr.bf16.mxu0 0
        %2845 = vmatmul.mubr.bf16.gmra.mrb[0].mxu0 %v2753
        %v2846 = vpop.f32.mrb[0].mxu0
        %v2847 = vadd.f32 0.0, %v2846
        %v2848 = vpop.f32.mrb[0].mxu0
        %v2849 = vpop.f32.mrb[0].mxu0
        %v2850 = vadd.f32 0.0, %v2849
        %v2851 = vpop.f32.mrb[0].mxu0
        %2852 = vmatprep.mubr.bf16.mxu0 0
        %2853 = vmatmul.mubr.bf16.gmra.mrb[0].mxu0 %v2755
        %v2854 = vpop.f32.mrb[0].mxu0
        %v2855 = vadd.f32 0.0, %v2854
        %v2856 = vpop.f32.mrb[0].mxu0
        %v2857 = vpop.f32.mrb[0].mxu0
        %v2858 = vadd.f32 0.0, %v2857
        %v2859 = vpop.f32.mrb[0].mxu0
        %2860 = vmatprep.mubr.bf16.mxu0 0
        %2861 = vmatmul.mubr.bf16.gmra.mrb[0].mxu0 %v2757
        %v2862 = vpop.f32.mrb[0].mxu0
        %v2863 = vadd.f32 0.0, %v2862
        %v2864 = vpop.f32.mrb[0].mxu0
        %v2865 = vpop.f32.mrb[0].mxu0
        %v2866 = vadd.f32 0.0, %v2865
        %v2867 = vpop.f32.mrb[0].mxu0
        %2868 = vmatprep.mubr.bf16.mxu0 0
        %2869 = vmatmul.mubr.bf16.gmra.mrb[0].mxu0 %v2759
        %v2870 = vpop.f32.mrb[0].mxu0
        %v2871 = vadd.f32 0.0, %v2870
        %v2872 = vpop.f32.mrb[0].mxu0
        %v2873 = vpop.f32.mrb[0].mxu0
        %v2874 = vadd.f32 0.0, %v2873
        %v2875 = vpop.f32.mrb[0].mxu0
        %2876 = vmatprep.mubr.bf16.mxu0 0
        %2877 = vmatmul.mubr.bf16.gmra.mrb[0].mxu0 %v2761
        %v2878 = vpop.f32.mrb[0].mxu0
        %v2879 = vadd.f32 0.0, %v2878
        %v2880 = vpop.f32.mrb[0].mxu0
        %v2881 = vpop.f32.mrb[0].mxu0
        %v2882 = vadd.f32 0.0, %v2881
        %v2883 = vpop.f32.mrb[0].mxu0
        %2884 = vmatprep.mubr.bf16.mxu0 0
        %2885 = vmatmul.mubr.bf16.gmra.mrb[0].mxu0 %v2763
        %v2886 = vpop.f32.mrb[0].mxu0
        %v2887 = vadd.f32 0.0, %v2886
        %v2888 = vpop.f32.mrb[0].mxu0
        %v2889 = vpop.f32.mrb[0].mxu0
        %v2890 = vadd.f32 0.0, %v2889
        %v2891 = vpop.f32.mrb[0].mxu0
        %2892 = vmatprep.mubr.bf16.mxu0 0
        %2893 = vmatmul.mubr.bf16.gmra.mrb[0].mxu0 %v2765
        %v2894 = vpop.f32.mrb[0].mxu0
        %v2895 = vadd.f32 0.0, %v2894
        %v2896 = vpop.f32.mrb[0].mxu0
        %v2897 = vpop.f32.mrb[0].mxu0
        %v2898 = vadd.f32 0.0, %v2897
        %v2899 = vpop.f32.mrb[0].mxu0
        %2900 = vmatprep.mubr.bf16.mxu0 0
        %2901 = vmatmul.mubr.bf16.gmra.mrb[0].mxu0 %v2767
        %v2902 = vpop.f32.mrb[0].mxu0
        %v2903 = vadd.f32 0.0, %v2902
        %v2904 = vpop.f32.mrb[0].mxu0
        %v2905 = vpop.f32.mrb[0].mxu0
        %v2906 = vadd.f32 0.0, %v2905
        %v2907 = vpop.f32.mrb[0].mxu0
        %2908 = vmatprep.mubr.bf16.mxu0 0
        %2909 = vmatmul.mubr.bf16.gmra.mrb[0].mxu0 %v2769
        %v2910 = vpop.f32.mrb[0].mxu0
        %v2911 = vadd.f32 0.0, %v2910
        %v2912 = vpop.f32.mrb[0].mxu0
        %v2913 = vpop.f32.mrb[0].mxu0
        %v2914 = vadd.f32 0.0, %v2913
        %v2915 = vpop.f32.mrb[0].mxu0
        %2916 = vmatprep.mubr.bf16.mxu0 0
        %2917 = vmatmul.mubr.bf16.gmra.mrb[0].mxu0 %v2771
        %v2918 = vpop.f32.mrb[0].mxu0
        %v2919 = vadd.f32 0.0, %v2918
        %v2920 = vpop.f32.mrb[0].mxu0
        %v2921 = vpop.f32.mrb[0].mxu0
        %v2922 = vadd.f32 0.0, %v2921
        %v2923 = vpop.f32.mrb[0].mxu0
        %2924 = vmatprep.mubr.bf16.mxu0 0
        %2925 = vmatmul.mubr.bf16.gmra.mrb[0].mxu0 %v2773
        %v2926 = vpop.f32.mrb[0].mxu0
        %v2927 = vadd.f32 0.0, %v2926
        %v2928 = vpop.f32.mrb[0].mxu0
        %v2929 = vpop.f32.mrb[0].mxu0
        %v2930 = vadd.f32 0.0, %v2929
        %v2931 = vpop.f32.mrb[0].mxu0
        %2932 = vmatprep.mubr.bf16.mxu0 0
        %2933 = vmatmul.mubr.bf16.gmra.mrb[0].mxu0 %v2775
        %v2934 = vpop.f32.mrb[0].mxu0
        %v2935 = vadd.f32 0.0, %v2934
        %v2936 = vpop.f32.mrb[0].mxu0
        %v2937 = vpop.f32.mrb[0].mxu0
        %v2938 = vadd.f32 0.0, %v2937
        %v2939 = vpop.f32.mrb[0].mxu0
        %2940 = vdwg.mxu0
        %v2941 = vadd.f32 %v2705, %v2815
        %v2942 = vadd.f32 %v2706, %v2818
        %v2943 = vadd.f32 %v2707, %v2823
        %v2944 = vadd.f32 %v2708, %v2826
        %v2945 = vadd.f32 %v2709, %v2831
        %v2946 = vadd.f32 %v2710, %v2834
        %v2947 = vadd.f32 %v2711, %v2839
        %v2948 = vadd.f32 %v2712, %v2842
        %v2949 = vadd.f32 %v2713, %v2847
        %v2950 = vadd.f32 %v2714, %v2850
        %v2951 = vadd.f32 %v2715, %v2855
        %v2952 = vadd.f32 %v2716, %v2858
        %v2953 = vadd.f32 %v2717, %v2863
        %v2954 = vadd.f32 %v2718, %v2866
        %v2955 = vadd.f32 %v2719, %v2871
        %v2956 = vadd.f32 %v2720, %v2874
        %v2957 = vadd.f32 %v2721, %v2879
        %v2958 = vadd.f32 %v2722, %v2882
        %v2959 = vadd.f32 %v2723, %v2887
        %v2960 = vadd.f32 %v2724, %v2890
        %v2961 = vadd.f32 %v2725, %v2895
        %v2962 = vadd.f32 %v2726, %v2898
        %v2963 = vadd.f32 %v2727, %v2903
        %v2964 = vadd.f32 %v2728, %v2906
        %v2965 = vadd.f32 %v2729, %v2911
        %v2966 = vadd.f32 %v2730, %v2914
        %v2967 = vadd.f32 %v2731, %v2919
        %v2968 = vadd.f32 %v2732, %v2922
        %v2969 = vadd.f32 %v2733, %v2927
        %v2970 = vadd.f32 %v2734, %v2930
        %v2971 = vadd.f32 %v2735, %v2935
        %v2972 = vadd.f32 %v2736, %v2938
        %2973 = vst [vmem:[#allocation2] sm:$0xff] %v2941
        %2974 = vst [vmem:[#allocation2 + $0x8] sm:$0xff] %v2942
        %2975 = vst [vmem:[#allocation2 + $0x10] sm:$0xff] %v2943
        %2976 = vst [vmem:[#allocation2 + $0x18] sm:$0xff] %v2944
        %2977 = vst [vmem:[#allocation2 + $0x20] sm:$0xff] %v2945
        %2978 = vst [vmem:[#allocation2 + $0x28] sm:$0xff] %v2946
        %2979 = vst [vmem:[#allocation2 + $0x30] sm:$0xff] %v2947
        %2980 = vst [vmem:[#allocation2 + $0x38] sm:$0xff] %v2948
        %2981 = vst [vmem:[#allocation2 + $0x40] sm:$0xff] %v2949
        %2982 = vst [vmem:[#allocation2 + $0x48] sm:$0xff] %v2950
        %2983 = vst [vmem:[#allocation2 + $0x50] sm:$0xff] %v2951
        %2984 = vst [vmem:[#allocation2 + $0x58] sm:$0xff] %v2952
        %2985 = vst [vmem:[#allocation2 + $0x60] sm:$0xff] %v2953
        %2986 = vst [vmem:[#allocation2 + $0x68] sm:$0xff] %v2954
        %2987 = vst [vmem:[#allocation2 + $0x70] sm:$0xff] %v2955
        %2988 = vst [vmem:[#allocation2 + $0x78] sm:$0xff] %v2956
        %2989 = vst [vmem:[#allocation2 + $0x80] sm:$0xff] %v2957
        %2990 = vst [vmem:[#allocation2 + $0x88] sm:$0xff] %v2958
        %2991 = vst [vmem:[#allocation2 + $0x90] sm:$0xff] %v2959
        %2992 = vst [vmem:[#allocation2 + $0x98] sm:$0xff] %v2960
        %2993 = vst [vmem:[#allocation2 + $0xa0] sm:$0xff] %v2961
        %2994 = vst [vmem:[#allocation2 + $0xa8] sm:$0xff] %v2962
        %2995 = vst [vmem:[#allocation2 + $0xb0] sm:$0xff] %v2963
        %2996 = vst [vmem:[#allocation2 + $0xb8] sm:$0xff] %v2964
        %2997 = vst [vmem:[#allocation2 + $0xc0] sm:$0xff] %v2965
        %2998 = vst [vmem:[#allocation2 + $0xc8] sm:$0xff] %v2966
        %2999 = vst [vmem:[#allocation2 + $0xd0] sm:$0xff] %v2967
        %3000 = vst [vmem:[#allocation2 + $0xd8] sm:$0xff] %v2968
        %3001 = vst [vmem:[#allocation2 + $0xe0] sm:$0xff] %v2969
        %3002 = vst [vmem:[#allocation2 + $0xe8] sm:$0xff] %v2970
        %3003 = vst [vmem:[#allocation2 + $0xf0] sm:$0xff] %v2971
        %3004 = vst [vmem:[#allocation2 + $0xf8] sm:$0xff] %v2972
        %v3005 = vld [vmem:[#allocation2] sm:$0xff]
        %v3006 = vld [vmem:[#allocation2 + $0x8] sm:$0xff]
        %v3007 = vld [vmem:[#allocation2 + $0x10] sm:$0xff]
        %v3008 = vld [vmem:[#allocation2 + $0x18] sm:$0xff]
        %v3009 = vld [vmem:[#allocation2 + $0x20] sm:$0xff]
        %v3010 = vld [vmem:[#allocation2 + $0x28] sm:$0xff]
        %v3011 = vld [vmem:[#allocation2 + $0x30] sm:$0xff]
        %v3012 = vld [vmem:[#allocation2 + $0x38] sm:$0xff]
        %v3013 = vld [vmem:[#allocation2 + $0x40] sm:$0xff]
        %v3014 = vld [vmem:[#allocation2 + $0x48] sm:$0xff]
        %v3015 = vld [vmem:[#allocation2 + $0x50] sm:$0xff]
        %v3016 = vld [vmem:[#allocation2 + $0x58] sm:$0xff]
        %v3017 = vld [vmem:[#allocation2 + $0x60] sm:$0xff]
        %v3018 = vld [vmem:[#allocation2 + $0x68] sm:$0xff]
        %v3019 = vld [vmem:[#allocation2 + $0x70] sm:$0xff]
        %v3020 = vld [vmem:[#allocation2 + $0x78] sm:$0xff]
        %v3021 = vld [vmem:[#allocation2 + $0x80] sm:$0xff]
        %v3022 = vld [vmem:[#allocation2 + $0x88] sm:$0xff]
        %v3023 = vld [vmem:[#allocation2 + $0x90] sm:$0xff]
        %v3024 = vld [vmem:[#allocation2 + $0x98] sm:$0xff]
        %v3025 = vld [vmem:[#allocation2 + $0xa0] sm:$0xff]
        %v3026 = vld [vmem:[#allocation2 + $0xa8] sm:$0xff]
        %v3027 = vld [vmem:[#allocation2 + $0xb0] sm:$0xff]
        %v3028 = vld [vmem:[#allocation2 + $0xb8] sm:$0xff]
        %v3029 = vld [vmem:[#allocation2 + $0xc0] sm:$0xff]
        %v3030 = vld [vmem:[#allocation2 + $0xc8] sm:$0xff]
        %v3031 = vld [vmem:[#allocation2 + $0xd0] sm:$0xff]
        %v3032 = vld [vmem:[#allocation2 + $0xd8] sm:$0xff]
        %v3033 = vld [vmem:[#allocation2 + $0xe0] sm:$0xff]
        %v3034 = vld [vmem:[#allocation2 + $0xe8] sm:$0xff]
        %v3035 = vld [vmem:[#allocation2 + $0xf0] sm:$0xff]
        %v3036 = vld [vmem:[#allocation2 + $0xf8] sm:$0xff]
        %v3037 = vpack.c.bf16 %v3006, %v3005
        %v3038 = vpack.c.bf16 %v3008, %v3007
        %v3039 = vpack.c.bf16 %v3010, %v3009
        %v3040 = vpack.c.bf16 %v3012, %v3011
        %v3041 = vpack.c.bf16 %v3014, %v3013
        %v3042 = vpack.c.bf16 %v3016, %v3015
        %v3043 = vpack.c.bf16 %v3018, %v3017
        %v3044 = vpack.c.bf16 %v3020, %v3019
        %v3045 = vpack.c.bf16 %v3022, %v3021
        %v3046 = vpack.c.bf16 %v3024, %v3023
        %v3047 = vpack.c.bf16 %v3026, %v3025
        %v3048 = vpack.c.bf16 %v3028, %v3027
        %v3049 = vpack.c.bf16 %v3030, %v3029
        %v3050 = vpack.c.bf16 %v3032, %v3031
        %v3051 = vpack.c.bf16 %v3034, %v3033
        %v3052 = vpack.c.bf16 %v3036, %v3035
        %v3069 = vunpack.c.l.b16 %v3037
        %v3070 = vunpack.c.h.b16 %v3037
        %v3071 = vunpack.c.l.b16 %v3038
        %v3072 = vunpack.c.h.b16 %v3038
        %v3073 = vunpack.c.l.b16 %v3039
        %v3074 = vunpack.c.h.b16 %v3039
        %v3075 = vunpack.c.l.b16 %v3040
        %v3076 = vunpack.c.h.b16 %v3040
        %v3077 = vunpack.c.l.b16 %v3041
        %v3078 = vunpack.c.h.b16 %v3041
        %v3079 = vunpack.c.l.b16 %v3042
        %v3080 = vunpack.c.h.b16 %v3042
        %v3081 = vunpack.c.l.b16 %v3043
        %v3082 = vunpack.c.h.b16 %v3043
        %v3083 = vunpack.c.l.b16 %v3044
        %v3084 = vunpack.c.h.b16 %v3044
        %v3085 = vunpack.c.l.b16 %v3045
        %v3086 = vunpack.c.h.b16 %v3045
        %v3087 = vunpack.c.l.b16 %v3046
        %v3088 = vunpack.c.h.b16 %v3046
        %v3089 = vunpack.c.l.b16 %v3047
        %v3090 = vunpack.c.h.b16 %v3047
        %v3091 = vunpack.c.l.b16 %v3048
        %v3092 = vunpack.c.h.b16 %v3048
        %v3093 = vunpack.c.l.b16 %v3049
        %v3094 = vunpack.c.h.b16 %v3049
        %v3095 = vunpack.c.l.b16 %v3050
        %v3096 = vunpack.c.h.b16 %v3050
        %v3097 = vunpack.c.l.b16 %v3051
        %v3098 = vunpack.c.h.b16 %v3051
        %v3099 = vunpack.c.l.b16 %v3052
        %v3100 = vunpack.c.h.b16 %v3052
        %v3101 = vpack.c.b16 %v3069, %v3069
        %v3102 = vpack.c.b16 %v3070, %v3070
        %v3103 = vpack.c.b16 %v3071, %v3071
        %v3104 = vpack.c.b16 %v3072, %v3072
        %v3105 = vpack.c.b16 %v3073, %v3073
        %v3106 = vpack.c.b16 %v3074, %v3074
        %v3107 = vpack.c.b16 %v3075, %v3075
        %v3108 = vpack.c.b16 %v3076, %v3076
        %v3109 = vpack.c.b16 %v3077, %v3077
        %v3110 = vpack.c.b16 %v3078, %v3078
        %v3111 = vpack.c.b16 %v3079, %v3079
        %v3112 = vpack.c.b16 %v3080, %v3080
        %v3113 = vpack.c.b16 %v3081, %v3081
        %v3114 = vpack.c.b16 %v3082, %v3082
        %v3115 = vpack.c.b16 %v3083, %v3083
        %v3116 = vpack.c.b16 %v3084, %v3084
        %v3117 = vpack.c.b16 %v3085, %v3085
        %v3118 = vpack.c.b16 %v3086, %v3086
        %v3119 = vpack.c.b16 %v3087, %v3087
        %v3120 = vpack.c.b16 %v3088, %v3088
        %v3121 = vpack.c.b16 %v3089, %v3089
        %v3122 = vpack.c.b16 %v3090, %v3090
        %v3123 = vpack.c.b16 %v3091, %v3091
        %v3124 = vpack.c.b16 %v3092, %v3092
        %v3125 = vpack.c.b16 %v3093, %v3093
        %v3126 = vpack.c.b16 %v3094, %v3094
        %v3127 = vpack.c.b16 %v3095, %v3095
        %v3128 = vpack.c.b16 %v3096, %v3096
        %v3129 = vpack.c.b16 %v3097, %v3097
        %v3130 = vpack.c.b16 %v3098, %v3098
        %v3131 = vpack.c.b16 %v3099, %v3099
        %v3132 = vpack.c.b16 %v3100, %v3100
        %3165 = vst [vmem:[%s210] sm:$0xf] %v3101
        %3166 = vst [vmem:[%s210 + $0x4] sm:$0xf] %v3102
        %3167 = vst [vmem:[%s210 + $0x8] sm:$0xf] %v3103
        %3168 = vst [vmem:[%s210 + $0xc] sm:$0xf] %v3104
        %3169 = vst [vmem:[%s210 + $0x10] sm:$0xf] %v3105
        %3170 = vst [vmem:[%s210 + $0x14] sm:$0xf] %v3106
        %3171 = vst [vmem:[%s210 + $0x18] sm:$0xf] %v3107
        %3172 = vst [vmem:[%s210 + $0x1c] sm:$0xf] %v3108
        %3173 = vst [vmem:[%s210 + $0x20] sm:$0xf] %v3109
        %3174 = vst [vmem:[%s210 + $0x24] sm:$0xf] %v3110
        %3175 = vst [vmem:[%s210 + $0x28] sm:$0xf] %v3111
        %3176 = vst [vmem:[%s210 + $0x2c] sm:$0xf] %v3112
        %3177 = vst [vmem:[%s210 + $0x30] sm:$0xf] %v3113
        %3178 = vst [vmem:[%s210 + $0x34] sm:$0xf] %v3114
        %3179 = vst [vmem:[%s210 + $0x38] sm:$0xf] %v3115
        %3180 = vst [vmem:[%s210 + $0x3c] sm:$0xf] %v3116
        %3181 = vst [vmem:[%s210 + $0x40] sm:$0xf] %v3117
        %3182 = vst [vmem:[%s210 + $0x44] sm:$0xf] %v3118
        %3183 = vst [vmem:[%s210 + $0x48] sm:$0xf] %v3119
        %3184 = vst [vmem:[%s210 + $0x4c] sm:$0xf] %v3120
        %3185 = vst [vmem:[%s210 + $0x50] sm:$0xf] %v3121
        %3186 = vst [vmem:[%s210 + $0x54] sm:$0xf] %v3122
        %3187 = vst [vmem:[%s210 + $0x58] sm:$0xf] %v3123
        %3188 = vst [vmem:[%s210 + $0x5c] sm:$0xf] %v3124
        %3189 = vst [vmem:[%s210 + $0x60] sm:$0xf] %v3125
        %3190 = vst [vmem:[%s210 + $0x64] sm:$0xf] %v3126
        %3191 = vst [vmem:[%s210 + $0x68] sm:$0xf] %v3127
        %3192 = vst [vmem:[%s210 + $0x6c] sm:$0xf] %v3128
        %3193 = vst [vmem:[%s210 + $0x70] sm:$0xf] %v3129
        %3194 = vst [vmem:[%s210 + $0x74] sm:$0xf] %v3130
        %3195 = vst [vmem:[%s210 + $0x78] sm:$0xf] %v3131
        %3196 = vst [vmem:[%s210 + $0x7c] sm:$0xf] %v3132
        %s3197 = sand.u32 %s126, 1
        %s3198 = scalar_lea.sflag [#allocation4], %s3197
        %s3199 = sand.u32 %s126, 1
        %s3200 = smul.addr %s3199, 128
        %s3201 = scalar_lea.vmem [#allocation3], %s3200
        // Predicated region
        $region33: #{tpu_custom_call.1} parent=31 // pred_check
          %p3202 = pneg %p136
        $region34: #{tpu_custom_call.1} parent=31 // pred_check_branch
          %3204 = sbr.rel (%p3202) target = $region36
        $region35: #{tpu_custom_call.1} parent=31 // pred_region
          %s3205 = smul.u32 32, %s24
          %s3207 = ssub.s32 2048, 2048
          %3208 = vsyncadd %s3198, %s3207
          %s3209 = sadd.s32 %s22, %s3205
          %s3210 = smul.addr %s23, 32
          %s3211 = sadd.s32 %s3209, %s3210
          %s3212 = smul.addr %s3211, 64
          %s3213 = scalar_lea.hbm %s3, %s3212
          %s3214 = sshll.u32 %s3201, 4
          %s3215 = int_to_ptr.vmem [resolvable:$true] %s3214
          %3220 = dma.vmem_to_hbm [thread:$0]  %s3215, 2048, %s3213, %s3198, 64, 64, 4
        $region36: #{tpu_custom_call.1} parent=31 // pred_fallthru
          _
      $region32: #{tpu_custom_call.1} parent=5 // pred_fallthru
        _
      %p3221 = scmp.le.s32.totalorder 2, %s12
      // Predicated region
      $region37: #{tpu_custom_call.1} parent=5 // pred_check
        %p3222 = pneg %p3221
      $region38: #{tpu_custom_call.1} parent=5 // pred_check_branch
        %3224 = sbr.rel (%p3222) target = $region40
      $region39: #{tpu_custom_call.1} parent=5 // pred_region
        %s3225 = ssub.s32 %s12, 2
        // Predicated region
        $region41: #{tpu_custom_call.1} parent=39 // pred_check
          %p3226 = pneg %p142
        $region42: #{tpu_custom_call.1} parent=39 // pred_check_branch
          %3228 = sbr.rel (%p3226) target = $region44
        $region43: #{tpu_custom_call.1} parent=39 // pred_region
          %s3229 = sand.u32 %s127, 1
          %s3230 = scalar_lea.sflag [#allocation4], %s3229
          %s3231 = sand.u32 %s127, 1
          %s3232 = smul.addr %s3231, 128
          %s3233 = scalar_lea.vmem [#allocation3], %s3232
          %3234 = dma.done %s3230, 2048
        $region44: #{tpu_custom_call.1} parent=39 // pred_fallthru
          _
      $region40: #{tpu_custom_call.1} parent=5 // pred_fallthru
        _
    $region6: #{tpu_custom_call.1} parent=1 // loop_footer
      %s16 = sadd.s32 1, %s12
    $region7: #{tpu_custom_call.1} parent=1 // loop_footer_branch
      %11 = sbr.rel target = $region3
    $region8: #{tpu_custom_call.1} parent=1 // loop_exit
      _
    %3235 = vsyncpa [#allocation4], 1
    %s3236 = scalar_lea.sflag [#allocation4], 1
    %3237 = vsyncpa %s3236, 1

</llo_original>
